<compile_context>
chip_gen: v7x
topology: tpu7x:2x2x1
jax: 0.10.0
libtpu: 0.0.40
codegen_flags: <defaults>
</compile_context>

<pallas_src>
import functools
import inspect

import jax
import jax.numpy as jnp
from jax.experimental import pallas as pl
from jax.experimental.pallas import tpu as pltpu

LANE = 128      # vreg lane width
SUBLANE = 8     # vreg sublane count
_VMEM_BUDGET = 44 * 1024 * 1024   # conservative: fits v7x's 64 MiB/TC with headroom

# Feature-detect single-buffering support (pipeline_mode=pl.Buffered(1)).
try:
    _HAS_BUFFERED = (
        hasattr(pl, "Buffered")
        and "pipeline_mode" in inspect.signature(pl.BlockSpec).parameters
    )
except Exception:  # pragma: no cover - very old/odd JAX
    _HAS_BUFFERED = False


def _round_up(n, m):
    return ((n + m - 1) // m) * m


def _cdiv(a, b):
    return -(-a // b)


def _deep_relu_kernel(x_ref, w1_ref, b1_ref, w2_ref, b2_ref,
                      w3_ref, b3_ref, w4_ref, b4_ref, o_ref):
    cdt = w1_ref.dtype  # bf16 compute dtype for the MXU

    # lin1 (no ReLU before it, per the PyTorch module)
    h = jnp.dot(x_ref[...], w1_ref[...],
                preferred_element_type=jnp.float32) + b1_ref[...]
    # lin2(relu(.))
    h = jnp.maximum(h, 0.0).astype(cdt)
    h = jnp.dot(h, w2_ref[...],
                preferred_element_type=jnp.float32) + b2_ref[...]
    # lin3(relu(.))
    h = jnp.maximum(h, 0.0).astype(cdt)
    h = jnp.dot(h, w3_ref[...],
                preferred_element_type=jnp.float32) + b3_ref[...]
    # lin4(relu(.))
    h = jnp.maximum(h, 0.0).astype(cdt)
    o = jnp.dot(h, w4_ref[...],
                preferred_element_type=jnp.float32) + b4_ref[...]
    # sigmoid epilogue on the f32 accumulator (exp / recip hit the EUP)
    o_ref[...] = jax.nn.sigmoid(o).astype(o_ref.dtype)


def prepare_params(params, *, compute_dtype=jnp.bfloat16):
    """Pad feature dims to 128-lane multiples and cast weights to the MXU
    dtype ONCE (hoisted out of the per-call path). Zero padding is exact:
    padded bias = 0 -> relu(0) = 0 multiplied into zero-padded weight rows."""
    (w1, b1), (w2, b2), (w3, b3), (w4, b4) = params
    D_in, H = w1.shape
    D_out = w4.shape[1]
    d_in_p = _round_up(D_in, LANE)
    h_p = _round_up(H, LANE)
    d_out_p = _round_up(D_out, LANE)

    def pad_w(w, rows, cols):
        return jnp.pad(w, ((0, rows - w.shape[0]),
                           (0, cols - w.shape[1]))).astype(compute_dtype)

    def pad_b(b, cols):
        # Biases stay f32: added to the f32 accumulator.
        return jnp.pad(b.reshape(1, -1),
                       ((0, 0), (0, cols - b.shape[0]))).astype(jnp.float32)

    arrays = (pad_w(w1, d_in_p, h_p), pad_b(b1, h_p),
              pad_w(w2, h_p, h_p),    pad_b(b2, h_p),
              pad_w(w3, h_p, h_p),    pad_b(b3, h_p),
              pad_w(w4, h_p, d_out_p), pad_b(b4, d_out_p))
    dims = dict(D_in=D_in, H=H, D_out=D_out,
                d_in_p=d_in_p, h_p=h_p, d_out_p=d_out_p,
                compute_dtype=compute_dtype)
    return dims, arrays


def deep_relu_forward(x, prepared, *, block_batch=512,
                      out_dtype=jnp.bfloat16, single_buffer_weights=True):
    """Fused 4-layer MLP forward. `prepared` comes from prepare_params()."""
    dims, (w1p, b1p, w2p, b2p, w3p, b3p, w4p, b4p) = prepared
    D_in, D_out = dims["D_in"], dims["D_out"]
    d_in_p, h_p, d_out_p = dims["d_in_p"], dims["h_p"], dims["d_out_p"]
    compute_dtype = dims["compute_dtype"]
    comp_bytes = jnp.dtype(compute_dtype).itemsize
    out_bytes = jnp.dtype(out_dtype).itemsize

    B = x.shape[0]
    assert x.shape[1] == D_in
    bp = _round_up(B, SUBLANE)

    use_single_buf = bool(single_buffer_weights and _HAS_BUFFERED)
    weight_bufs = 1 if use_single_buf else 2

    def vmem_est(tb):
        weights = weight_bufs * comp_bytes * (
            d_in_p * h_p + 2 * h_p * h_p + h_p * d_out_p)
        biases = weight_bufs * 4 * (3 * h_p + d_out_p)
        io = 2 * tb * (d_in_p * comp_bytes + d_out_p * out_bytes)   # x/out DB
        live = 3 * tb * h_p * 4                                     # live f32 acts
        return weights + biases + io + live

    if vmem_est(SUBLANE) > _VMEM_BUDGET:
        # TODO(synk): stream W2/W3 per K-chunk (pltpu.emit_pipeline) for H large
        # enough that the resident weights outgrow v7x's 64 MiB VMEM.
        raise ValueError("DeepRelu weights too large for the resident-weight kernel")

    # Largest sublane-aligned batch tile <= block_batch that fits the budget.
    tb = min(_round_up(block_batch, SUBLANE), bp)
    while tb > SUBLANE and vmem_est(tb) > _VMEM_BUDGET:
        tb = _round_up(tb // 2, SUBLANE)

    # Balanced tiles (tail padding <= 7 rows) and >= 2 grid steps whenever the
    # batch allows, so "parallel" can shard steps across both v7x TensorCores.
    min_steps = 2 if bp >= 2 * SUBLANE else 1
    n_steps = max(_cdiv(bp, tb), min_steps)
    tb = _round_up(_cdiv(bp, n_steps), SUBLANE)
    n_steps = _cdiv(bp, tb)
    bp = n_steps * tb

    xp = jnp.pad(x, ((0, bp - B), (0, d_in_p - D_in))).astype(compute_dtype)

    vmem_limit = int(min(64 << 20, max(16 << 20, int(vmem_est(tb) * 1.25))))

    resident_kw = {"pipeline_mode": pl.Buffered(1)} if use_single_buf else {}

    out = pl.pallas_call(
        _deep_relu_kernel,
        out_shape=jax.ShapeDtypeStruct((bp, d_out_p), out_dtype),
        grid=(n_steps,),
        in_specs=[
            pl.BlockSpec((tb, d_in_p), lambda i: (i, 0)),                 # x (tiled)
            pl.BlockSpec((d_in_p, h_p), lambda i: (0, 0), **resident_kw),  # W1
            pl.BlockSpec((1, h_p), lambda i: (0, 0), **resident_kw),       # b1
            pl.BlockSpec((h_p, h_p), lambda i: (0, 0), **resident_kw),     # W2
            pl.BlockSpec((1, h_p), lambda i: (0, 0), **resident_kw),       # b2
            pl.BlockSpec((h_p, h_p), lambda i: (0, 0), **resident_kw),     # W3
            pl.BlockSpec((1, h_p), lambda i: (0, 0), **resident_kw),       # b3
            pl.BlockSpec((h_p, d_out_p), lambda i: (0, 0), **resident_kw), # W4
            pl.BlockSpec((1, d_out_p), lambda i: (0, 0), **resident_kw),   # b4
        ],
        out_specs=pl.BlockSpec((tb, d_out_p), lambda i: (i, 0)),
        compiler_params=pltpu.CompilerParams(
            dimension_semantics=("parallel",),
            vmem_limit_bytes=vmem_limit),
    )(xp, w1p, b1p, w2p, b2p, w3p, b3p, w4p, b4p)

    return out[:B, :D_out]


def deep_relu_reference(x, params, compute_dtype=None):
    """Plain-JAX reference. If compute_dtype is set, mirror the kernel's
    bf16-matmul / f32-accumulate numerics; otherwise pure f32."""
    (w1, b1), (w2, b2), (w3, b3), (w4, b4) = params

    def mm(a, w):
        if compute_dtype is not None:
            a = a.astype(compute_dtype)
            w = w.astype(compute_dtype)
        return jnp.dot(a, w, preferred_element_type=jnp.float32)

    h = mm(x, w1) + b1
    h = mm(jnp.maximum(h, 0.0), w2) + b2
    h = mm(jnp.maximum(h, 0.0), w3) + b3
    o = mm(jnp.maximum(h, 0.0), w4) + b4
    return jax.nn.sigmoid(o)


def init_params(key, d_in, h, d_out, dtype=jnp.float32):
    """nn.Linear-style init: uniform +/- 1/sqrt(fan_in) for W and b."""
    def linear(k, fan_in, fan_out):
        kw, kb = jax.random.split(k)
        bound = 1.0 / (fan_in ** 0.5)
        w = jax.random.uniform(kw, (fan_in, fan_out), dtype, -bound, bound)
        b = jax.random.uniform(kb, (fan_out,), dtype, -bound, bound)
        return w, b

    k1, k2, k3, k4 = jax.random.split(key, 4)
    return (linear(k1, d_in, h),
            linear(k2, h, h),
            linear(k3, h, h),
            linear(k4, h, d_out))


if __name__ == "__main__":
    key = jax.random.PRNGKey(0)
    kx, kp = jax.random.split(key)

    batch, d_in, hidden, d_out = 24, 32, 64, 16   # exercises a 2-step batch grid
    x = jax.random.normal(kx, (batch, d_in), jnp.float32)
    params = init_params(kp, d_in, hidden, d_out)

    # Hoisted, cached weight padding/cast (done once, reused across calls).
    prepped = prepare_params(params)

    def run(single_buffer):
        fwd = jax.jit(functools.partial(
            deep_relu_forward, prepared=prepped,
            single_buffer_weights=single_buffer))
        return jax.block_until_ready(fwd(x))

    try:
        y = run(True)
    except Exception:
        # Fall back to default double-buffered resident weights if this JAX /
        # Mosaic build rejects pipeline_mode=pl.Buffered(1).
        y = run(False)

    assert y.shape == (batch, d_out)
    y32 = y.astype(jnp.float32)

    # Exact-semantics check (reference mirrors bf16 matmul / f32 accumulate;
    # remaining delta is the bf16 output rounding of sigmoid in [0, 1]).
    ref_bf16 = deep_relu_reference(x, params, compute_dtype=jnp.bfloat16)
    assert jnp.allclose(y32, ref_bf16, atol=1e-2, rtol=1e-2), \
        float(jnp.max(jnp.abs(y32 - ref_bf16)))

    # Sanity check against the pure-f32 PyTorch-equivalent forward.
    ref_f32 = deep_relu_reference(x, params, compute_dtype=None)
    assert jnp.allclose(y32, ref_f32, atol=5e-2, rtol=5e-2), \
        float(jnp.max(jnp.abs(y32 - ref_f32)))

    print("KERNEL_OK")
</pallas_src>

<mosaic_0001>
module attributes {stable_mosaic.version = 11 : i64} {
  func.func @_deep_relu_kernel(%arg0: i32, %arg1: memref<16x128xbf16, #tpu.memory_space<vmem>>, %arg2: memref<128x128xbf16, #tpu.memory_space<vmem>>, %arg3: memref<1x128xf32, #tpu.memory_space<vmem>>, %arg4: memref<128x128xbf16, #tpu.memory_space<vmem>>, %arg5: memref<1x128xf32, #tpu.memory_space<vmem>>, %arg6: memref<128x128xbf16, #tpu.memory_space<vmem>>, %arg7: memref<1x128xf32, #tpu.memory_space<vmem>>, %arg8: memref<128x128xbf16, #tpu.memory_space<vmem>>, %arg9: memref<1x128xf32, #tpu.memory_space<vmem>>, %arg10: memref<16x128xbf16, #tpu.memory_space<vmem>>) attributes {dimension_semantics = [#tpu.dimension_semantics<parallel>], iteration_bounds = array<i64: 2>, scalar_prefetch = 0 : i64, scratch_operands = 0 : i64, tpu.core_type = #tpu.core_type<tc>, window_params = [{transform_indices = @transform_0, window_bounds = array<i64: 16, 128>}, {pipeline_mode = #tpu.pipeline_mode<synchronous>, transform_indices = @transform_1, window_bounds = array<i64: 128, 128>}, {pipeline_mode = #tpu.pipeline_mode<synchronous>, transform_indices = @transform_2, window_bounds = array<i64: 1, 128>}, {pipeline_mode = #tpu.pipeline_mode<synchronous>, transform_indices = @transform_3, window_bounds = array<i64: 128, 128>}, {pipeline_mode = #tpu.pipeline_mode<synchronous>, transform_indices = @transform_4, window_bounds = array<i64: 1, 128>}, {pipeline_mode = #tpu.pipeline_mode<synchronous>, transform_indices = @transform_5, window_bounds = array<i64: 128, 128>}, {pipeline_mode = #tpu.pipeline_mode<synchronous>, transform_indices = @transform_6, window_bounds = array<i64: 1, 128>}, {pipeline_mode = #tpu.pipeline_mode<synchronous>, transform_indices = @transform_7, window_bounds = array<i64: 128, 128>}, {pipeline_mode = #tpu.pipeline_mode<synchronous>, transform_indices = @transform_8, window_bounds = array<i64: 1, 128>}, {transform_indices = @transform_9, window_bounds = array<i64: 16, 128>}]} {
    %c0 = arith.constant 0 : index
    %c0_0 = arith.constant 0 : index
    %0 = vector.load %arg1[%c0, %c0_0] : memref<16x128xbf16, #tpu.memory_space<vmem>>, vector<16x128xbf16>
    %c0_1 = arith.constant 0 : index
    %c0_2 = arith.constant 0 : index
    %1 = vector.load %arg2[%c0_1, %c0_2] : memref<128x128xbf16, #tpu.memory_space<vmem>>, vector<128x128xbf16>
    %cst = arith.constant dense<0.000000e+00> : vector<16x128xf32>
    %2 = tpu.matmul %0, %1, %cst {dimension_numbers = #tpu.dot_dimension_numbers<[1], [0], [0], [1], [0, 0, 1, 1], [], []>} : vector<16x128xbf16>, vector<128x128xbf16>, vector<16x128xf32> -> vector<16x128xf32>
    %c0_3 = arith.constant 0 : index
    %c0_4 = arith.constant 0 : index
    %3 = vector.load %arg3[%c0_3, %c0_4] : memref<1x128xf32, #tpu.memory_space<vmem>>, vector<1x128xf32>
    %4 = vector.broadcast %3 : vector<1x128xf32> to vector<16x128xf32>
    %5 = arith.addf %2, %4 : vector<16x128xf32>
    %cst_5 = arith.constant 0.000000e+00 : f32
    %6 = vector.broadcast %cst_5 : f32 to vector<16x128xf32>
    %7 = arith.maximumf %5, %6 : vector<16x128xf32>
    %8 = arith.truncf %7 : vector<16x128xf32> to vector<16x128xbf16>
    %c0_6 = arith.constant 0 : index
    %c0_7 = arith.constant 0 : index
    %9 = vector.load %arg4[%c0_6, %c0_7] : memref<128x128xbf16, #tpu.memory_space<vmem>>, vector<128x128xbf16>
    %cst_8 = arith.constant dense<0.000000e+00> : vector<16x128xf32>
    %10 = tpu.matmul %8, %9, %cst_8 {dimension_numbers = #tpu.dot_dimension_numbers<[1], [0], [0], [1], [0, 0, 1, 1], [], []>} : vector<16x128xbf16>, vector<128x128xbf16>, vector<16x128xf32> -> vector<16x128xf32>
    %c0_9 = arith.constant 0 : index
    %c0_10 = arith.constant 0 : index
    %11 = vector.load %arg5[%c0_9, %c0_10] : memref<1x128xf32, #tpu.memory_space<vmem>>, vector<1x128xf32>
    %12 = vector.broadcast %11 : vector<1x128xf32> to vector<16x128xf32>
    %13 = arith.addf %10, %12 : vector<16x128xf32>
    %cst_11 = arith.constant 0.000000e+00 : f32
    %14 = vector.broadcast %cst_11 : f32 to vector<16x128xf32>
    %15 = arith.maximumf %13, %14 : vector<16x128xf32>
    %16 = arith.truncf %15 : vector<16x128xf32> to vector<16x128xbf16>
    %c0_12 = arith.constant 0 : index
    %c0_13 = arith.constant 0 : index
    %17 = vector.load %arg6[%c0_12, %c0_13] : memref<128x128xbf16, #tpu.memory_space<vmem>>, vector<128x128xbf16>
    %cst_14 = arith.constant dense<0.000000e+00> : vector<16x128xf32>
    %18 = tpu.matmul %16, %17, %cst_14 {dimension_numbers = #tpu.dot_dimension_numbers<[1], [0], [0], [1], [0, 0, 1, 1], [], []>} : vector<16x128xbf16>, vector<128x128xbf16>, vector<16x128xf32> -> vector<16x128xf32>
    %c0_15 = arith.constant 0 : index
    %c0_16 = arith.constant 0 : index
    %19 = vector.load %arg7[%c0_15, %c0_16] : memref<1x128xf32, #tpu.memory_space<vmem>>, vector<1x128xf32>
    %20 = vector.broadcast %19 : vector<1x128xf32> to vector<16x128xf32>
    %21 = arith.addf %18, %20 : vector<16x128xf32>
    %cst_17 = arith.constant 0.000000e+00 : f32
    %22 = vector.broadcast %cst_17 : f32 to vector<16x128xf32>
    %23 = arith.maximumf %21, %22 : vector<16x128xf32>
    %24 = arith.truncf %23 : vector<16x128xf32> to vector<16x128xbf16>
    %c0_18 = arith.constant 0 : index
    %c0_19 = arith.constant 0 : index
    %25 = vector.load %arg8[%c0_18, %c0_19] : memref<128x128xbf16, #tpu.memory_space<vmem>>, vector<128x128xbf16>
    %cst_20 = arith.constant dense<0.000000e+00> : vector<16x128xf32>
    %26 = tpu.matmul %24, %25, %cst_20 {dimension_numbers = #tpu.dot_dimension_numbers<[1], [0], [0], [1], [0, 0, 1, 1], [], []>} : vector<16x128xbf16>, vector<128x128xbf16>, vector<16x128xf32> -> vector<16x128xf32>
    %c0_21 = arith.constant 0 : index
    %c0_22 = arith.constant 0 : index
    %27 = vector.load %arg9[%c0_21, %c0_22] : memref<1x128xf32, #tpu.memory_space<vmem>>, vector<1x128xf32>
    %28 = vector.broadcast %27 : vector<1x128xf32> to vector<16x128xf32>
    %29 = arith.addf %26, %28 : vector<16x128xf32>
    %30 = arith.negf %29 : vector<16x128xf32>
    %31 = math.exp %30 : vector<16x128xf32>
    %cst_23 = arith.constant 1.000000e+00 : f32
    %32 = vector.broadcast %cst_23 : f32 to vector<16x128xf32>
    %33 = arith.addf %32, %31 : vector<16x128xf32>
    %34 = arith.divf %32, %33 : vector<16x128xf32>
    %35 = arith.truncf %34 : vector<16x128xf32> to vector<16x128xbf16>
    %c0_24 = arith.constant 0 : index
    %c0_25 = arith.constant 0 : index
    %36 = vector.load %arg10[%c0_24, %c0_25] : memref<16x128xbf16, #tpu.memory_space<vmem>>, vector<16x128xbf16>
    tpu.vector_store %arg10[%c0_24, %c0_25], %35 {strides = array<i32>} : memref<16x128xbf16, #tpu.memory_space<vmem>>, vector<16x128xbf16>,
    return
  }
  func.func @transform_0(%arg0: i32) -> (i32, i32) {
    %c0_i32 = arith.constant 0 : i32
    %c0_i32_0 = arith.constant 0 : i32
    return %arg0, %c0_i32 : i32, i32
  }
  func.func @transform_1(%arg0: i32) -> (i32, i32) {
    %c0_i32 = arith.constant 0 : i32
    %c0_i32_0 = arith.constant 0 : i32
    %c0_i32_1 = arith.constant 0 : i32
    return %c0_i32, %c0_i32_0 : i32, i32
  }
  func.func @transform_2(%arg0: i32) -> (i32, i32) {
    %c0_i32 = arith.constant 0 : i32
    %c0_i32_0 = arith.constant 0 : i32
    %c0_i32_1 = arith.constant 0 : i32
    return %c0_i32, %c0_i32_0 : i32, i32
  }
  func.func @transform_3(%arg0: i32) -> (i32, i32) {
    %c0_i32 = arith.constant 0 : i32
    %c0_i32_0 = arith.constant 0 : i32
    %c0_i32_1 = arith.constant 0 : i32
    return %c0_i32, %c0_i32_0 : i32, i32
  }
  func.func @transform_4(%arg0: i32) -> (i32, i32) {
    %c0_i32 = arith.constant 0 : i32
    %c0_i32_0 = arith.constant 0 : i32
    %c0_i32_1 = arith.constant 0 : i32
    return %c0_i32, %c0_i32_0 : i32, i32
  }
  func.func @transform_5(%arg0: i32) -> (i32, i32) {
    %c0_i32 = arith.constant 0 : i32
    %c0_i32_0 = arith.constant 0 : i32
    %c0_i32_1 = arith.constant 0 : i32
    return %c0_i32, %c0_i32_0 : i32, i32
  }
  func.func @transform_6(%arg0: i32) -> (i32, i32) {
    %c0_i32 = arith.constant 0 : i32
    %c0_i32_0 = arith.constant 0 : i32
    %c0_i32_1 = arith.constant 0 : i32
    return %c0_i32, %c0_i32_0 : i32, i32
  }
  func.func @transform_7(%arg0: i32) -> (i32, i32) {
    %c0_i32 = arith.constant 0 : i32
    %c0_i32_0 = arith.constant 0 : i32
    %c0_i32_1 = arith.constant 0 : i32
    return %c0_i32, %c0_i32_0 : i32, i32
  }
  func.func @transform_8(%arg0: i32) -> (i32, i32) {
    %c0_i32 = arith.constant 0 : i32
    %c0_i32_0 = arith.constant 0 : i32
    %c0_i32_1 = arith.constant 0 : i32
    return %c0_i32, %c0_i32_0 : i32, i32
  }
  func.func @transform_9(%arg0: i32) -> (i32, i32) {
    %c0_i32 = arith.constant 0 : i32
    %c0_i32_0 = arith.constant 0 : i32
    return %arg0, %c0_i32 : i32, i32
  }
}

module attributes {stable_mosaic.version = 11 : i64} {
  func.func @_deep_relu_kernel(%arg0: i32, %arg1: memref<16x128xbf16, #tpu.memory_space<vmem>>, %arg2: memref<128x128xbf16, #tpu.memory_space<vmem>>, %arg3: memref<1x128xf32, #tpu.memory_space<vmem>>, %arg4: memref<128x128xbf16, #tpu.memory_space<vmem>>, %arg5: memref<1x128xf32, #tpu.memory_space<vmem>>, %arg6: memref<128x128xbf16, #tpu.memory_space<vmem>>, %arg7: memref<1x128xf32, #tpu.memory_space<vmem>>, %arg8: memref<128x128xbf16, #tpu.memory_space<vmem>>, %arg9: memref<1x128xf32, #tpu.memory_space<vmem>>, %arg10: memref<16x128xbf16, #tpu.memory_space<vmem>>) attributes {dimension_semantics = [#tpu.dimension_semantics<parallel>], iteration_bounds = array<i64: 2>, scalar_prefetch = 0 : i64, scratch_operands = 0 : i64, tpu.core_type = #tpu.core_type<tc>, window_params = [{transform_indices = @transform_0, window_bounds = array<i64: 16, 128>}, {pipeline_mode = #tpu.pipeline_mode<synchronous>, transform_indices = @transform_1, window_bounds = array<i64: 128, 128>}, {pipeline_mode = #tpu.pipeline_mode<synchronous>, transform_indices = @transform_2, window_bounds = array<i64: 1, 128>}, {pipeline_mode = #tpu.pipeline_mode<synchronous>, transform_indices = @transform_3, window_bounds = array<i64: 128, 128>}, {pipeline_mode = #tpu.pipeline_mode<synchronous>, transform_indices = @transform_4, window_bounds = array<i64: 1, 128>}, {pipeline_mode = #tpu.pipeline_mode<synchronous>, transform_indices = @transform_5, window_bounds = array<i64: 128, 128>}, {pipeline_mode = #tpu.pipeline_mode<synchronous>, transform_indices = @transform_6, window_bounds = array<i64: 1, 128>}, {pipeline_mode = #tpu.pipeline_mode<synchronous>, transform_indices = @transform_7, window_bounds = array<i64: 128, 128>}, {pipeline_mode = #tpu.pipeline_mode<synchronous>, transform_indices = @transform_8, window_bounds = array<i64: 1, 128>}, {transform_indices = @transform_9, window_bounds = array<i64: 16, 128>}]} {
    %c0 = arith.constant 0 : index
    %c0_0 = arith.constant 0 : index
    %0 = vector.load %arg1[%c0, %c0_0] : memref<16x128xbf16, #tpu.memory_space<vmem>>, vector<16x128xbf16>
    %c0_1 = arith.constant 0 : index
    %c0_2 = arith.constant 0 : index
    %1 = vector.load %arg2[%c0_1, %c0_2] : memref<128x128xbf16, #tpu.memory_space<vmem>>, vector<128x128xbf16>
    %cst = arith.constant dense<0.000000e+00> : vector<16x128xf32>
    %2 = tpu.matmul %0, %1, %cst {dimension_numbers = #tpu.dot_dimension_numbers<[1], [0], [0], [1], [0, 0, 1, 1], [], []>} : vector<16x128xbf16>, vector<128x128xbf16>, vector<16x128xf32> -> vector<16x128xf32>
    %c0_3 = arith.constant 0 : index
    %c0_4 = arith.constant 0 : index
    %3 = vector.load %arg3[%c0_3, %c0_4] : memref<1x128xf32, #tpu.memory_space<vmem>>, vector<1x128xf32>
    %4 = vector.broadcast %3 : vector<1x128xf32> to vector<16x128xf32>
    %5 = arith.addf %2, %4 : vector<16x128xf32>
    %cst_5 = arith.constant 0.000000e+00 : f32
    %6 = vector.broadcast %cst_5 : f32 to vector<16x128xf32>
    %7 = arith.maximumf %5, %6 : vector<16x128xf32>
    %8 = arith.truncf %7 : vector<16x128xf32> to vector<16x128xbf16>
    %c0_6 = arith.constant 0 : index
    %c0_7 = arith.constant 0 : index
    %9 = vector.load %arg4[%c0_6, %c0_7] : memref<128x128xbf16, #tpu.memory_space<vmem>>, vector<128x128xbf16>
    %cst_8 = arith.constant dense<0.000000e+00> : vector<16x128xf32>
    %10 = tpu.matmul %8, %9, %cst_8 {dimension_numbers = #tpu.dot_dimension_numbers<[1], [0], [0], [1], [0, 0, 1, 1], [], []>} : vector<16x128xbf16>, vector<128x128xbf16>, vector<16x128xf32> -> vector<16x128xf32>
    %c0_9 = arith.constant 0 : index
    %c0_10 = arith.constant 0 : index
    %11 = vector.load %arg5[%c0_9, %c0_10] : memref<1x128xf32, #tpu.memory_space<vmem>>, vector<1x128xf32>
    %12 = vector.broadcast %11 : vector<1x128xf32> to vector<16x128xf32>
    %13 = arith.addf %10, %12 : vector<16x128xf32>
    %cst_11 = arith.constant 0.000000e+00 : f32
    %14 = vector.broadcast %cst_11 : f32 to vector<16x128xf32>
    %15 = arith.maximumf %13, %14 : vector<16x128xf32>
    %16 = arith.truncf %15 : vector<16x128xf32> to vector<16x128xbf16>
    %c0_12 = arith.constant 0 : index
    %c0_13 = arith.constant 0 : index
    %17 = vector.load %arg6[%c0_12, %c0_13] : memref<128x128xbf16, #tpu.memory_space<vmem>>, vector<128x128xbf16>
    %cst_14 = arith.constant dense<0.000000e+00> : vector<16x128xf32>
    %18 = tpu.matmul %16, %17, %cst_14 {dimension_numbers = #tpu.dot_dimension_numbers<[1], [0], [0], [1], [0, 0, 1, 1], [], []>} : vector<16x128xbf16>, vector<128x128xbf16>, vector<16x128xf32> -> vector<16x128xf32>
    %c0_15 = arith.constant 0 : index
    %c0_16 = arith.constant 0 : index
    %19 = vector.load %arg7[%c0_15, %c0_16] : memref<1x128xf32, #tpu.memory_space<vmem>>, vector<1x128xf32>
    %20 = vector.broadcast %19 : vector<1x128xf32> to vector<16x128xf32>
    %21 = arith.addf %18, %20 : vector<16x128xf32>
    %cst_17 = arith.constant 0.000000e+00 : f32
    %22 = vector.broadcast %cst_17 : f32 to vector<16x128xf32>
    %23 = arith.maximumf %21, %22 : vector<16x128xf32>
    %24 = arith.truncf %23 : vector<16x128xf32> to vector<16x128xbf16>
    %c0_18 = arith.constant 0 : index
    %c0_19 = arith.constant 0 : index
    %25 = vector.load %arg8[%c0_18, %c0_19] : memref<128x128xbf16, #tpu.memory_space<vmem>>, vector<128x128xbf16>
    %cst_20 = arith.constant dense<0.000000e+00> : vector<16x128xf32>
    %26 = tpu.matmul %24, %25, %cst_20 {dimension_numbers = #tpu.dot_dimension_numbers<[1], [0], [0], [1], [0, 0, 1, 1], [], []>} : vector<16x128xbf16>, vector<128x128xbf16>, vector<16x128xf32> -> vector<16x128xf32>
    %c0_21 = arith.constant 0 : index
    %c0_22 = arith.constant 0 : index
    %27 = vector.load %arg9[%c0_21, %c0_22] : memref<1x128xf32, #tpu.memory_space<vmem>>, vector<1x128xf32>
    %28 = vector.broadcast %27 : vector<1x128xf32> to vector<16x128xf32>
    %29 = arith.addf %26, %28 : vector<16x128xf32>
    %30 = arith.negf %29 : vector<16x128xf32>
    %31 = math.exp %30 : vector<16x128xf32>
    %cst_23 = arith.constant 1.000000e+00 : f32
    %32 = vector.broadcast %cst_23 : f32 to vector<16x128xf32>
    %33 = arith.addf %32, %31 : vector<16x128xf32>
    %34 = arith.divf %32, %33 : vector<16x128xf32>
    %35 = arith.truncf %34 : vector<16x128xf32> to vector<16x128xbf16>
    %c0_24 = arith.constant 0 : index
    %c0_25 = arith.constant 0 : index
    %36 = vector.load %arg10[%c0_24, %c0_25] : memref<16x128xbf16, #tpu.memory_space<vmem>>, vector<16x128xbf16>
    tpu.vector_store %arg10[%c0_24, %c0_25], %35 {strides = array<i32>} : memref<16x128xbf16, #tpu.memory_space<vmem>>, vector<16x128xbf16>,
    return
  }
  func.func @transform_0(%arg0: i32) -> (i32, i32) {
    %c0_i32 = arith.constant 0 : i32
    %c0_i32_0 = arith.constant 0 : i32
    return %arg0, %c0_i32 : i32, i32
  }
  func.func @transform_1(%arg0: i32) -> (i32, i32) {
    %c0_i32 = arith.constant 0 : i32
    %c0_i32_0 = arith.constant 0 : i32
    %c0_i32_1 = arith.constant 0 : i32
    return %c0_i32, %c0_i32_0 : i32, i32
  }
  func.func @transform_2(%arg0: i32) -> (i32, i32) {
    %c0_i32 = arith.constant 0 : i32
    %c0_i32_0 = arith.constant 0 : i32
    %c0_i32_1 = arith.constant 0 : i32
    return %c0_i32, %c0_i32_0 : i32, i32
  }
  func.func @transform_3(%arg0: i32) -> (i32, i32) {
    %c0_i32 = arith.constant 0 : i32
    %c0_i32_0 = arith.constant 0 : i32
    %c0_i32_1 = arith.constant 0 : i32
    return %c0_i32, %c0_i32_0 : i32, i32
  }
  func.func @transform_4(%arg0: i32) -> (i32, i32) {
    %c0_i32 = arith.constant 0 : i32
    %c0_i32_0 = arith.constant 0 : i32
    %c0_i32_1 = arith.constant 0 : i32
    return %c0_i32, %c0_i32_0 : i32, i32
  }
  func.func @transform_5(%arg0: i32) -> (i32, i32) {
    %c0_i32 = arith.constant 0 : i32
    %c0_i32_0 = arith.constant 0 : i32
    %c0_i32_1 = arith.constant 0 : i32
    return %c0_i32, %c0_i32_0 : i32, i32
  }
  func.func @transform_6(%arg0: i32) -> (i32, i32) {
    %c0_i32 = arith.constant 0 : i32
    %c0_i32_0 = arith.constant 0 : i32
    %c0_i32_1 = arith.constant 0 : i32
    return %c0_i32, %c0_i32_0 : i32, i32
  }
  func.func @transform_7(%arg0: i32) -> (i32, i32) {
    %c0_i32 = arith.constant 0 : i32
    %c0_i32_0 = arith.constant 0 : i32
    %c0_i32_1 = arith.constant 0 : i32
    return %c0_i32, %c0_i32_0 : i32, i32
  }
  func.func @transform_8(%arg0: i32) -> (i32, i32) {
    %c0_i32 = arith.constant 0 : i32
    %c0_i32_0 = arith.constant 0 : i32
    %c0_i32_1 = arith.constant 0 : i32
    return %c0_i32, %c0_i32_0 : i32, i32
  }
  func.func @transform_9(%arg0: i32) -> (i32, i32) {
    %c0_i32 = arith.constant 0 : i32
    %c0_i32_0 = arith.constant 0 : i32
    return %arg0, %c0_i32 : i32, i32
  }
}

</mosaic_0001>

<llo_original>
// kernel: deep_relu_forward.1
$region0: #{deep_relu_forward.1}
  #allocation0 [shape = 'u32[]', space=smem, size = 0x4, offset = 0x4, fixed_abs, tag = 'smem constant byte address 0x4 - core index']
  #allocation1 [shape = 'u32[144,128]{1,0:T(1,128)}', space=vmem, size = 0x12000, scoped, tag = 'internal scratch']
  %s0 = inlined_call_operand.vmem [shape: bf16[32,128], index: 0, kind: input, shape index: {}]
  %s1 = inlined_call_operand.hbm [shape: bf16[128,128], index: 1, kind: input, shape index: {}]
  %s2 = inlined_call_operand.vmem [shape: f32[1,128], index: 2, kind: input, shape index: {}]
  %s3 = inlined_call_operand.hbm [shape: bf16[128,128], index: 3, kind: input, shape index: {}]
  %s4 = inlined_call_operand.vmem [shape: f32[1,128], index: 4, kind: input, shape index: {}]
  %s5 = inlined_call_operand.hbm [shape: bf16[128,128], index: 5, kind: input, shape index: {}]
  %s6 = inlined_call_operand.vmem [shape: f32[1,128], index: 6, kind: input, shape index: {}]
  %s7 = inlined_call_operand.vmem [shape: bf16[128,128], index: 7, kind: input, shape index: {}]
  %s8 = inlined_call_operand.vmem [shape: f32[1,128], index: 8, kind: input, shape index: {}]
  %s9 = inlined_call_operand.vmem [shape: bf16[32,128], index: 9, kind: output, shape index: {}]
  %s10 = sld [smem:[#allocation0]]
  $region81: #{deep_relu_forward.1} parent=0
    _
  %s12 = ssub.s32 1, %s10
  %s13 = scalar_select 0, %s12, %s10
  $region1: #{deep_relu_forward.1} parent=0
    #allocation2 [shape = 'u8[32768]{0}', space=vmem, size = 0x8000, scoped, tag = 'input window, operand 1, single buffered']
    #allocation3 [shape = 's32[2]{0}', space=sflag, size = 0x8, scoped, tag = 'scoped memory for deep_relu_forward.1']
    #allocation4 [shape = 'u8[32768]{0}', space=vmem, size = 0x8000, scoped, tag = 'input window, operand 3, single buffered']
    #allocation5 [shape = 's32[1]{0}', space=sflag, size = 0x4, scoped, tag = 'scoped memory for deep_relu_forward.1']
    #allocation6 [shape = 'u8[32768]{0}', space=vmem, size = 0x8000, scoped, tag = 'input window, operand 5, single buffered']
    %14 = vsyncpa [#allocation3], 0
    %15 = vsyncpa [#allocation5], 0
    loop: start=0, step=1, limit=4
    $region2: #{deep_relu_forward.1} parent=1 // loop_pre_header
      _
    $region3: #{deep_relu_forward.1} parent=1 // loop_header
      %s17 = sphi 0, %s21
      %p18 = scmp.ge.s32.totalorder %s17, 4
      %s27 = sphi 0, %s29
      %s30 = sphi 0, %s27
      %s31 = sphi 0, %s30
      %s47 = sphi 0, %s31
      %s51 = sphi 0, %s51
      %s53 = sphi 0, %s51
      %s54 = sphi 0, %s53
      %s68 = sphi 0, %s54
      %s72 = sphi 0, %s72
      %s74 = sphi 0, %s72
      %s75 = sphi 0, %s74
      %s89 = sphi 0, %s75
      %s93 = sphi 0, %s93
      %s95 = sphi 0, %s93
      %s96 = sphi 0, %s95
      %s110 = sphi 0, %s96
      %s114 = sphi 0, %s114
      %s116 = sphi 0, %s114
      %s117 = sphi 0, %s116
      %s131 = sphi 0, %s117
      %s135 = sphi 0, %s135
      %s137 = sphi 0, %s135
      %s138 = sphi 0, %s137
      %s152 = sphi 0, %s138
      %s156 = sphi 0, %s156
      %s158 = sphi 0, %s156
      %s159 = sphi 0, %s158
      %s173 = sphi 0, %s159
      %s177 = sphi 0, %s177
      %s179 = sphi 0, %s177
      %s180 = sphi 0, %s179
      %s194 = sphi 0, %s180
      %s198 = sphi 0, %s198
      %s200 = sphi 0, %s198
      %s201 = sphi 0, %s200
      %s215 = sphi 0, %s201
      %s221 = sphi 0, %s223
      %s224 = sphi 0, %s221
      %s225 = sphi 0, %s224
      %s241 = sphi 0, %s225
    $region4: #{deep_relu_forward.1} parent=1 // loop_header_branch
      %20 = sbr.rel (%p18) target = $region8
    $region5: #{deep_relu_forward.1} parent=1 // loop_body
      %s22 = ssub.s32 %s17, 1
      %s23 = ssub.s32 %s17, 2
      %s24 = sadd.s32 %s17, 1
      %s25 = ssub.s32 %s17, %s24
      %p26 = scmp.eq.s32.totalorder %s25, 0
      %s28 = sadd.s32 %s27, 1
      %s29 = scalar_select %p26, %s27, %s28
      %p32 = pneg %p26
      %p33 = scmp.eq.s32.totalorder %s17, 1
      %p34 = por %p32, %p33
      %p35 = scmp.ne.s32.totalorder %s27, %s30
      %p36 = scmp.eq.s32.totalorder %s17, 0
      %p37 = por %p35, %p36
      %p38 = scmp.ne.s32.totalorder %s27, %s30
      %p39 = scmp.eq.s32.totalorder %s22, 1
      %p40 = por %p38, %p39
      %p41 = scmp.ne.s32.totalorder %s30, %s31
      %p42 = scmp.eq.s32.totalorder %s22, 0
      %p43 = por %p41, %p42
      %p44 = scmp.ne.s32.totalorder %s30, %s31
      %p45 = scmp.eq.s32.totalorder %s23, 1
      %p46 = por %p44, %p45
      %p48 = scmp.ne.s32.totalorder %s31, %s47
      %p49 = scmp.eq.s32.totalorder %s23, 0
      %p50 = por %p48, %p49
      %s52 = sadd.s32 %s51, 1
      %p55 = scmp.eq.s32.totalorder %s17, 1
      %p56 = scmp.ne.s32.totalorder %s51, %s53
      %p57 = scmp.eq.s32.totalorder %s17, 0
      %p58 = por %p56, %p57
      %p59 = scmp.ne.s32.totalorder %s51, %s53
      %p60 = scmp.eq.s32.totalorder %s22, 1
      %p61 = por %p59, %p60
      %p62 = scmp.ne.s32.totalorder %s53, %s54
      %p63 = scmp.eq.s32.totalorder %s22, 0
      %p64 = por %p62, %p63
      %p65 = scmp.ne.s32.totalorder %s53, %s54
      %p66 = scmp.eq.s32.totalorder %s23, 1
      %p67 = por %p65, %p66
      %p69 = scmp.ne.s32.totalorder %s54, %s68
      %p70 = scmp.eq.s32.totalorder %s23, 0
      %p71 = por %p69, %p70
      %s73 = sadd.s32 %s72, 1
      %p76 = scmp.eq.s32.totalorder %s17, 1
      %p77 = scmp.ne.s32.totalorder %s72, %s74
      %p78 = scmp.eq.s32.totalorder %s17, 0
      %p79 = por %p77, %p78
      %p80 = scmp.ne.s32.totalorder %s72, %s74
      %p81 = scmp.eq.s32.totalorder %s22, 1
      %p82 = por %p80, %p81
      %p83 = scmp.ne.s32.totalorder %s74, %s75
      %p84 = scmp.eq.s32.totalorder %s22, 0
      %p85 = por %p83, %p84
      %p86 = scmp.ne.s32.totalorder %s74, %s75
      %p87 = scmp.eq.s32.totalorder %s23, 1
      %p88 = por %p86, %p87
      %p90 = scmp.ne.s32.totalorder %s75, %s89
      %p91 = scmp.eq.s32.totalorder %s23, 0
      %p92 = por %p90, %p91
      %s94 = sadd.s32 %s93, 1
      %p97 = scmp.eq.s32.totalorder %s17, 1
      %p98 = scmp.ne.s32.totalorder %s93, %s95
      %p99 = scmp.eq.s32.totalorder %s17, 0
      %p100 = por %p98, %p99
      %p101 = scmp.ne.s32.totalorder %s93, %s95
      %p102 = scmp.eq.s32.totalorder %s22, 1
      %p103 = por %p101, %p102
      %p104 = scmp.ne.s32.totalorder %s95, %s96
      %p105 = scmp.eq.s32.totalorder %s22, 0
      %p106 = por %p104, %p105
      %p107 = scmp.ne.s32.totalorder %s95, %s96
      %p108 = scmp.eq.s32.totalorder %s23, 1
      %p109 = por %p107, %p108
      %p111 = scmp.ne.s32.totalorder %s96, %s110
      %p112 = scmp.eq.s32.totalorder %s23, 0
      %p113 = por %p111, %p112
      %s115 = sadd.s32 %s114, 1
      %p118 = scmp.eq.s32.totalorder %s17, 1
      %p119 = scmp.ne.s32.totalorder %s114, %s116
      %p120 = scmp.eq.s32.totalorder %s17, 0
      %p121 = por %p119, %p120
      %p122 = scmp.ne.s32.totalorder %s114, %s116
      %p123 = scmp.eq.s32.totalorder %s22, 1
      %p124 = por %p122, %p123
      %p125 = scmp.ne.s32.totalorder %s116, %s117
      %p126 = scmp.eq.s32.totalorder %s22, 0
      %p127 = por %p125, %p126
      %p128 = scmp.ne.s32.totalorder %s116, %s117
      %p129 = scmp.eq.s32.totalorder %s23, 1
      %p130 = por %p128, %p129
      %p132 = scmp.ne.s32.totalorder %s117, %s131
      %p133 = scmp.eq.s32.totalorder %s23, 0
      %p134 = por %p132, %p133
      %s136 = sadd.s32 %s135, 1
      %p139 = scmp.eq.s32.totalorder %s17, 1
      %p140 = scmp.ne.s32.totalorder %s135, %s137
      %p141 = scmp.eq.s32.totalorder %s17, 0
      %p142 = por %p140, %p141
      %p143 = scmp.ne.s32.totalorder %s135, %s137
      %p144 = scmp.eq.s32.totalorder %s22, 1
      %p145 = por %p143, %p144
      %p146 = scmp.ne.s32.totalorder %s137, %s138
      %p147 = scmp.eq.s32.totalorder %s22, 0
      %p148 = por %p146, %p147
      %p149 = scmp.ne.s32.totalorder %s137, %s138
      %p150 = scmp.eq.s32.totalorder %s23, 1
      %p151 = por %p149, %p150
      %p153 = scmp.ne.s32.totalorder %s138, %s152
      %p154 = scmp.eq.s32.totalorder %s23, 0
      %p155 = por %p153, %p154
      %s157 = sadd.s32 %s156, 1
      %p160 = scmp.eq.s32.totalorder %s17, 1
      %p161 = scmp.ne.s32.totalorder %s156, %s158
      %p162 = scmp.eq.s32.totalorder %s17, 0
      %p163 = por %p161, %p162
      %p164 = scmp.ne.s32.totalorder %s156, %s158
      %p165 = scmp.eq.s32.totalorder %s22, 1
      %p166 = por %p164, %p165
      %p167 = scmp.ne.s32.totalorder %s158, %s159
      %p168 = scmp.eq.s32.totalorder %s22, 0
      %p169 = por %p167, %p168
      %p170 = scmp.ne.s32.totalorder %s158, %s159
      %p171 = scmp.eq.s32.totalorder %s23, 1
      %p172 = por %p170, %p171
      %p174 = scmp.ne.s32.totalorder %s159, %s173
      %p175 = scmp.eq.s32.totalorder %s23, 0
      %p176 = por %p174, %p175
      %s178 = sadd.s32 %s177, 1
      %p181 = scmp.eq.s32.totalorder %s17, 1
      %p182 = scmp.ne.s32.totalorder %s177, %s179
      %p183 = scmp.eq.s32.totalorder %s17, 0
      %p184 = por %p182, %p183
      %p185 = scmp.ne.s32.totalorder %s177, %s179
      %p186 = scmp.eq.s32.totalorder %s22, 1
      %p187 = por %p185, %p186
      %p188 = scmp.ne.s32.totalorder %s179, %s180
      %p189 = scmp.eq.s32.totalorder %s22, 0
      %p190 = por %p188, %p189
      %p191 = scmp.ne.s32.totalorder %s179, %s180
      %p192 = scmp.eq.s32.totalorder %s23, 1
      %p193 = por %p191, %p192
      %p195 = scmp.ne.s32.totalorder %s180, %s194
      %p196 = scmp.eq.s32.totalorder %s23, 0
      %p197 = por %p195, %p196
      %s199 = sadd.s32 %s198, 1
      %p202 = scmp.eq.s32.totalorder %s17, 1
      %p203 = scmp.ne.s32.totalorder %s198, %s200
      %p204 = scmp.eq.s32.totalorder %s17, 0
      %p205 = por %p203, %p204
      %p206 = scmp.ne.s32.totalorder %s198, %s200
      %p207 = scmp.eq.s32.totalorder %s22, 1
      %p208 = por %p206, %p207
      %p209 = scmp.ne.s32.totalorder %s200, %s201
      %p210 = scmp.eq.s32.totalorder %s22, 0
      %p211 = por %p209, %p210
      %p212 = scmp.ne.s32.totalorder %s200, %s201
      %p213 = scmp.eq.s32.totalorder %s23, 1
      %p214 = por %p212, %p213
      %p216 = scmp.ne.s32.totalorder %s201, %s215
      %p217 = scmp.eq.s32.totalorder %s23, 0
      %p218 = por %p216, %p217
      %s219 = ssub.s32 %s17, %s24
      %p220 = scmp.eq.s32.totalorder %s219, 0
      %s222 = sadd.s32 %s221, 1
      %s223 = scalar_select %p220, %s221, %s222
      %p226 = pneg %p220
      %p227 = scmp.eq.s32.totalorder %s17, 1
      %p228 = por %p226, %p227
      %p229 = scmp.ne.s32.totalorder %s221, %s224
      %p230 = scmp.eq.s32.totalorder %s17, 0
      %p231 = por %p229, %p230
      %p232 = scmp.ne.s32.totalorder %s221, %s224
      %p233 = scmp.eq.s32.totalorder %s22, 1
      %p234 = por %p232, %p233
      %p235 = scmp.ne.s32.totalorder %s224, %s225
      %p236 = scmp.eq.s32.totalorder %s22, 0
      %p237 = por %p235, %p236
      %p238 = scmp.ne.s32.totalorder %s224, %s225
      %p239 = scmp.eq.s32.totalorder %s23, 1
      %p240 = por %p238, %p239
      %p242 = scmp.ne.s32.totalorder %s225, %s241
      %p243 = scmp.eq.s32.totalorder %s23, 0
      %p244 = por %p242, %p243
      %p245 = scmp.le.s32.totalorder 1, %s17
      %p246 = scmp.lt.s32.totalorder %s17, 3
      %p247 = pnand %p245, %p246
      %p248 = pneg %p247
      // Predicated region
      $region9: #{deep_relu_forward.1} parent=5 // pred_check
        _
      $region10: #{deep_relu_forward.1} parent=5 // pred_check_branch
        %250 = sbr.rel (%p247) target = $region12
      $region11: #{deep_relu_forward.1} parent=5 // pred_region
        %s251 = ssub.s32 %s17, 1
        // Predicated region
        $region13: #{deep_relu_forward.1} parent=11 // pred_check
          %p252 = pneg %p64
        $region14: #{deep_relu_forward.1} parent=11 // pred_check_branch
          %254 = sbr.rel (%p252) target = $region16
        $region15: #{deep_relu_forward.1} parent=11 // pred_region
          %s256 = ssub.s32 1024, 1024
          %257 = vsyncadd [#allocation3], %s256
          %s258 = sshll.u32 [#allocation2], 4
          %s259 = int_to_ptr.vmem [resolvable:$true] %s258
          %264 = dma.hbm_to_vmem [thread:$0]  %s1, 1024, %s259, [#allocation3], 64, 64, 4
        $region16: #{deep_relu_forward.1} parent=11 // pred_fallthru
          _
        // Predicated region
        $region17: #{deep_relu_forward.1} parent=11 // pred_check
          %p265 = pneg %p85
        $region18: #{deep_relu_forward.1} parent=11 // pred_check_branch
          %267 = sbr.rel (%p265) target = $region20
        $region19: #{deep_relu_forward.1} parent=11 // pred_region
          _
        $region20: #{deep_relu_forward.1} parent=11 // pred_fallthru
          _
        // Predicated region
        $region21: #{deep_relu_forward.1} parent=11 // pred_check
          %p268 = pneg %p106
        $region22: #{deep_relu_forward.1} parent=11 // pred_check_branch
          %270 = sbr.rel (%p268) target = $region24
        $region23: #{deep_relu_forward.1} parent=11 // pred_region
          %s272 = ssub.s32 1024, 1024
          %273 = vsyncadd [#allocation5], %s272
          %s274 = sshll.u32 [#allocation4], 4
          %s275 = int_to_ptr.vmem [resolvable:$true] %s274
          %280 = dma.hbm_to_vmem [thread:$0]  %s3, 1024, %s275, [#allocation5], 64, 64, 4
        $region24: #{deep_relu_forward.1} parent=11 // pred_fallthru
          _
        // Predicated region
        $region25: #{deep_relu_forward.1} parent=11 // pred_check
          %p281 = pneg %p127
        $region26: #{deep_relu_forward.1} parent=11 // pred_check_branch
          %283 = sbr.rel (%p281) target = $region28
        $region27: #{deep_relu_forward.1} parent=11 // pred_region
          _
        $region28: #{deep_relu_forward.1} parent=11 // pred_fallthru
          _
        // Predicated region
        $region29: #{deep_relu_forward.1} parent=11 // pred_check
          %p284 = pneg %p148
        $region30: #{deep_relu_forward.1} parent=11 // pred_check_branch
          %286 = sbr.rel (%p284) target = $region32
        $region31: #{deep_relu_forward.1} parent=11 // pred_region
          %s288 = ssub.s32 1024, 1024
          %289 = vsyncadd [#allocation5], %s288
          %s290 = sshll.u32 [#allocation6], 4
          %s291 = int_to_ptr.vmem [resolvable:$true] %s290
          %296 = dma.hbm_to_vmem [thread:$0]  %s5, 1024, %s291, [#allocation5], 64, 64, 4
        $region32: #{deep_relu_forward.1} parent=11 // pred_fallthru
          _
        // Predicated region
        $region33: #{deep_relu_forward.1} parent=11 // pred_check
          %p297 = pneg %p169
        $region34: #{deep_relu_forward.1} parent=11 // pred_check_branch
          %299 = sbr.rel (%p297) target = $region36
        $region35: #{deep_relu_forward.1} parent=11 // pred_region
          _
        $region36: #{deep_relu_forward.1} parent=11 // pred_fallthru
          _
        // Predicated region
        $region37: #{deep_relu_forward.1} parent=11 // pred_check
          %p300 = pneg %p190
        $region38: #{deep_relu_forward.1} parent=11 // pred_check_branch
          %302 = sbr.rel (%p300) target = $region40
        $region39: #{deep_relu_forward.1} parent=11 // pred_region
          _
        $region40: #{deep_relu_forward.1} parent=11 // pred_fallthru
          _
        // Predicated region
        $region41: #{deep_relu_forward.1} parent=11 // pred_check
          %p303 = pneg %p211
        $region42: #{deep_relu_forward.1} parent=11 // pred_check_branch
          %305 = sbr.rel (%p303) target = $region44
        $region43: #{deep_relu_forward.1} parent=11 // pred_region
          _
        $region44: #{deep_relu_forward.1} parent=11 // pred_fallthru
          _
      $region12: #{deep_relu_forward.1} parent=5 // pred_fallthru
        _
      %p306 = scmp.lt.s32.totalorder %s17, 2
      // Predicated region
      $region45: #{deep_relu_forward.1} parent=5 // pred_check
        %p307 = pneg %p306
      $region46: #{deep_relu_forward.1} parent=5 // pred_check_branch
        %309 = sbr.rel (%p307) target = $region48
      $region47: #{deep_relu_forward.1} parent=5 // pred_region
        // Predicated region
        $region49: #{deep_relu_forward.1} parent=47 // pred_check
          %p310 = pneg %p37
        $region50: #{deep_relu_forward.1} parent=47 // pred_check_branch
          %312 = sbr.rel (%p310) target = $region52
        $region51: #{deep_relu_forward.1} parent=47 // pred_region
          %s313 = smul.u32 2, %s17
          %p314 = scmp.lt.s32.totalorder %s313, 3
          %s315 = scalar_select %p314, %s313, 3
          %s316 = smul.addr %s315, 4
          %s317 = scalar_lea.vmem %s0, %s316
          %s318 = smul.u32 2, %s17
        $region52: #{deep_relu_forward.1} parent=47 // pred_fallthru
          _
      $region48: #{deep_relu_forward.1} parent=5 // pred_fallthru
        _
      %p319 = scmp.le.s32.totalorder 1, %s17
      %p320 = scmp.lt.s32.totalorder %s17, 3
      %p321 = pnand %p319, %p320
      %p322 = pneg %p321
      // Predicated region
      $region53: #{deep_relu_forward.1} parent=5 // pred_check
        _
      $region54: #{deep_relu_forward.1} parent=5 // pred_check_branch
        %324 = sbr.rel (%p321) target = $region56
      $region55: #{deep_relu_forward.1} parent=5 // pred_region
        %s325 = ssub.s32 %s17, 1
        // Predicated region
        $region57: #{deep_relu_forward.1} parent=55 // pred_check
          %p326 = pneg %p64
        $region58: #{deep_relu_forward.1} parent=55 // pred_check_branch
          %328 = sbr.rel (%p326) target = $region60
        $region59: #{deep_relu_forward.1} parent=55 // pred_region
          %329 = dma.done [#allocation3], 1024
        $region60: #{deep_relu_forward.1} parent=55 // pred_fallthru
          _
        // Predicated region
        $region61: #{deep_relu_forward.1} parent=55 // pred_check
          %p330 = pneg %p106
        $region62: #{deep_relu_forward.1} parent=55 // pred_check_branch
          %332 = sbr.rel (%p330) target = $region64
        $region63: #{deep_relu_forward.1} parent=55 // pred_region
          %333 = dma.done [#allocation5], 1024
        $region64: #{deep_relu_forward.1} parent=55 // pred_fallthru
          _
        // Predicated region
        $region65: #{deep_relu_forward.1} parent=55 // pred_check
          %p334 = pneg %p148
        $region66: #{deep_relu_forward.1} parent=55 // pred_check_branch
          %336 = sbr.rel (%p334) target = $region68
        $region67: #{deep_relu_forward.1} parent=55 // pred_region
          %337 = dma.done [#allocation5], 1024
        $region68: #{deep_relu_forward.1} parent=55 // pred_fallthru
          _
        %s338 = smul.u32 2, %s22
        %p339 = scmp.lt.s32.totalorder %s338, 3
        %s340 = scalar_select %p339, %s338, 3
        %s341 = smul.addr %s340, 4
        %s342 = scalar_lea.vmem %s0, %s341
        %p343 = pneg %p43
        %p344 = pneg %p40
        %p345 = pneg %p64
        %p346 = pneg %p61
        %p347 = pneg %p85
        %p348 = pneg %p82
        %p349 = pneg %p106
        %p350 = pneg %p103
        %p351 = pneg %p127
        %p352 = pneg %p124
        %p353 = pneg %p148
        %p354 = pneg %p145
        %p355 = pneg %p169
        %p356 = pneg %p166
        %p357 = pneg %p190
        %p358 = pneg %p187
        %p359 = pneg %p211
        %p360 = pneg %p208
        %p361 = pneg %p237
        %p362 = pneg %p234
        %s363 = smul.u32 2, %s22
        %p364 = scmp.lt.s32.totalorder %s363, 3
        %s365 = scalar_select %p364, %s363, 3
        %s366 = smul.addr %s365, 4
        %s367 = scalar_lea.vmem %s9, %s366
        %s368 = smul.u32 2, %s22
        %p369 = scmp.lt.s32.totalorder %s368, 3
        %s370 = scalar_select %p369, %s368, 3
        %s371 = smul.addr %s370, 4
        %s372 = scalar_lea.vmem %s0, %s371
        %s373 = smul.u32 2, %s22
        %s374 = smul.u32 2, %s22
        %p375 = scmp.lt.s32.totalorder %s374, 3
        %s376 = scalar_select %p375, %s374, 3
        %s377 = smul.addr %s376, 4
        %s378 = scalar_lea.vmem %s9, %s377
        %s379 = smul.u32 2, %s22
        %v381 = vld [vmem:[%s372] sm:$0xf]
        %v382 = vld [vmem:[%s372 + $0x4] sm:$0xf]
        %v383 = vld [vmem:[#allocation2] sm:$0xf]
        %v384 = vld [vmem:[#allocation2 + $0x4] sm:$0xf]
        %v385 = vld [vmem:[#allocation2 + $0x8] sm:$0xf]
        %v386 = vld [vmem:[#allocation2 + $0xc] sm:$0xf]
        %v387 = vld [vmem:[#allocation2 + $0x10] sm:$0xf]
        %v388 = vld [vmem:[#allocation2 + $0x14] sm:$0xf]
        %v389 = vld [vmem:[#allocation2 + $0x18] sm:$0xf]
        %v390 = vld [vmem:[#allocation2 + $0x1c] sm:$0xf]
        %v391 = vld [vmem:[#allocation2 + $0x20] sm:$0xf]
        %v392 = vld [vmem:[#allocation2 + $0x24] sm:$0xf]
        %v393 = vld [vmem:[#allocation2 + $0x28] sm:$0xf]
        %v394 = vld [vmem:[#allocation2 + $0x2c] sm:$0xf]
        %v395 = vld [vmem:[#allocation2 + $0x30] sm:$0xf]
        %v396 = vld [vmem:[#allocation2 + $0x34] sm:$0xf]
        %v397 = vld [vmem:[#allocation2 + $0x38] sm:$0xf]
        %v398 = vld [vmem:[#allocation2 + $0x3c] sm:$0xf]
        %v399 = vld [vmem:[%s2] sm:$0x1]
        %v401 = vlaneseq
        %v402 = vshrl.u32 %v401, 7
        %v403 = vsub.s32 0, %v402
        %v404 = vrot.slane %v399, %v403
        %v408 = vunpack.c.l.b16 %v381
        %v409 = vunpack.c.l.b16 %v382
        %v410 = vpack.c.b16 %v409, %v408
        %v428 = vunpack.c.l.b16 %v383
        %v429 = vunpack.c.l.b16 %v384
        %v430 = vunpack.c.l.b16 %v385
        %v431 = vunpack.c.l.b16 %v386
        %v432 = vunpack.c.l.b16 %v387
        %v433 = vunpack.c.l.b16 %v388
        %v434 = vunpack.c.l.b16 %v389
        %v435 = vunpack.c.l.b16 %v390
        %v436 = vunpack.c.l.b16 %v391
        %v437 = vunpack.c.l.b16 %v392
        %v438 = vunpack.c.l.b16 %v393
        %v439 = vunpack.c.l.b16 %v394
        %v440 = vunpack.c.l.b16 %v395
        %v441 = vunpack.c.l.b16 %v396
        %v442 = vunpack.c.l.b16 %v397
        %v443 = vunpack.c.l.b16 %v398
        %v444 = vpack.c.b16 %v429, %v428
        %v445 = vpack.c.b16 %v431, %v430
        %v446 = vpack.c.b16 %v433, %v432
        %v447 = vpack.c.b16 %v435, %v434
        %v448 = vpack.c.b16 %v437, %v436
        %v449 = vpack.c.b16 %v439, %v438
        %v450 = vpack.c.b16 %v441, %v440
        %v451 = vpack.c.b16 %v443, %v442
        %460 = vmatprep.subr.bf16.mxu0 0
        %461 = vmatpush1.bf16.msra.mxu0 %v444
        %462 = vmatprep.subr.bf16.mxu0 0
        %463 = vmatpush1.bf16.msra.mxu0 %v445
        %464 = vmatprep.subr.bf16.mxu0 0
        %465 = vmatpush1.bf16.msra.mxu0 %v446
        %466 = vmatprep.subr.bf16.mxu0 0
        %467 = vmatpush1.bf16.msra.mxu0 %v447
        %468 = vmatprep.subr.bf16.mxu0 0
        %469 = vmatpush1.bf16.msra.mxu0 %v448
        %470 = vmatprep.subr.bf16.mxu0 0
        %471 = vmatpush1.bf16.msra.mxu0 %v449
        %472 = vmatprep.subr.bf16.mxu0 0
        %473 = vmatpush1.bf16.msra.mxu0 %v450
        %474 = vmatprep.subr.bf16.mxu0 0
        %475 = vmatpush1.bf16.msra.mxu0 %v451
        %476 = vmatprep.subr.bf16.mxu0 0
        %477 = vmatpush1.bf16.msra.mxu0 0
        %478 = vmatprep.subr.bf16.mxu0 0
        %479 = vmatpush1.bf16.msra.mxu0 0
        %480 = vmatprep.subr.bf16.mxu0 0
        %481 = vmatpush1.bf16.msra.mxu0 0
        %482 = vmatprep.subr.bf16.mxu0 0
        %483 = vmatpush1.bf16.msra.mxu0 0
        %484 = vmatprep.subr.bf16.mxu0 0
        %485 = vmatpush1.bf16.msra.mxu0 0
        %486 = vmatprep.subr.bf16.mxu0 0
        %487 = vmatpush1.bf16.msra.mxu0 0
        %488 = vmatprep.subr.bf16.mxu0 0
        %489 = vmatpush1.bf16.msra.mxu0 0
        %490 = vmatprep.subr.bf16.mxu0 0
        %491 = vmatpush1.bf16.msra.mxu0 0
        %492 = vmatprep.mubr.bf16.mxu0 0
        %493 = vmatmul.mubr.bf16.gmra.mrb[0].mxu0 %v410
        %v494 = vpop.f32.mrb[0].mxu0
        %v495 = vadd.f32 %v404, %v494
        %v496 = vpop.f32.mrb[0].mxu0
        %v497 = vpop.f32.mrb[0].mxu0
        %v498 = vadd.f32 %v404, %v497
        %v499 = vpop.f32.mrb[0].mxu0
        %500 = vdwg.mxu0
        %v501 = vmax.f32 %v495, 0.0
        %v502 = vmax.f32 %v498, 0.0
        %v503 = vpack.c.bf16 %v502, %v501
        %v504 = vld [vmem:[#allocation4] sm:$0xf]
        %v505 = vld [vmem:[#allocation4 + $0x4] sm:$0xf]
        %v506 = vld [vmem:[#allocation4 + $0x8] sm:$0xf]
        %v507 = vld [vmem:[#allocation4 + $0xc] sm:$0xf]
        %v508 = vld [vmem:[#allocation4 + $0x10] sm:$0xf]
        %v509 = vld [vmem:[#allocation4 + $0x14] sm:$0xf]
        %v510 = vld [vmem:[#allocation4 + $0x18] sm:$0xf]
        %v511 = vld [vmem:[#allocation4 + $0x1c] sm:$0xf]
        %v512 = vld [vmem:[#allocation4 + $0x20] sm:$0xf]
        %v513 = vld [vmem:[#allocation4 + $0x24] sm:$0xf]
        %v514 = vld [vmem:[#allocation4 + $0x28] sm:$0xf]
        %v515 = vld [vmem:[#allocation4 + $0x2c] sm:$0xf]
        %v516 = vld [vmem:[#allocation4 + $0x30] sm:$0xf]
        %v517 = vld [vmem:[#allocation4 + $0x34] sm:$0xf]
        %v518 = vld [vmem:[#allocation4 + $0x38] sm:$0xf]
        %v519 = vld [vmem:[#allocation4 + $0x3c] sm:$0xf]
        %v520 = vld [vmem:[%s4] sm:$0x1]
        %v522 = vlaneseq
        %v523 = vshrl.u32 %v522, 7
        %v524 = vsub.s32 0, %v523
        %v525 = vrot.slane %v520, %v524
        %v543 = vunpack.c.l.b16 %v504
        %v544 = vunpack.c.l.b16 %v505
        %v545 = vunpack.c.l.b16 %v506
        %v546 = vunpack.c.l.b16 %v507
        %v547 = vunpack.c.l.b16 %v508
        %v548 = vunpack.c.l.b16 %v509
        %v549 = vunpack.c.l.b16 %v510
        %v550 = vunpack.c.l.b16 %v511
        %v551 = vunpack.c.l.b16 %v512
        %v552 = vunpack.c.l.b16 %v513
        %v553 = vunpack.c.l.b16 %v514
        %v554 = vunpack.c.l.b16 %v515
        %v555 = vunpack.c.l.b16 %v516
        %v556 = vunpack.c.l.b16 %v517
        %v557 = vunpack.c.l.b16 %v518
        %v558 = vunpack.c.l.b16 %v519
        %v559 = vpack.c.b16 %v544, %v543
        %v560 = vpack.c.b16 %v546, %v545
        %v561 = vpack.c.b16 %v548, %v547
        %v562 = vpack.c.b16 %v550, %v549
        %v563 = vpack.c.b16 %v552, %v551
        %v564 = vpack.c.b16 %v554, %v553
        %v565 = vpack.c.b16 %v556, %v555
        %v566 = vpack.c.b16 %v558, %v557
        %575 = vmatprep.subr.bf16.mxu0 0
        %576 = vmatpush1.bf16.msra.mxu0 %v559
        %577 = vmatprep.subr.bf16.mxu0 0
        %578 = vmatpush1.bf16.msra.mxu0 %v560
        %579 = vmatprep.subr.bf16.mxu0 0
        %580 = vmatpush1.bf16.msra.mxu0 %v561
        %581 = vmatprep.subr.bf16.mxu0 0
        %582 = vmatpush1.bf16.msra.mxu0 %v562
        %583 = vmatprep.subr.bf16.mxu0 0
        %584 = vmatpush1.bf16.msra.mxu0 %v563
        %585 = vmatprep.subr.bf16.mxu0 0
        %586 = vmatpush1.bf16.msra.mxu0 %v564
        %587 = vmatprep.subr.bf16.mxu0 0
        %588 = vmatpush1.bf16.msra.mxu0 %v565
        %589 = vmatprep.subr.bf16.mxu0 0
        %590 = vmatpush1.bf16.msra.mxu0 %v566
        %591 = vmatprep.subr.bf16.mxu0 0
        %592 = vmatpush1.bf16.msra.mxu0 0
        %593 = vmatprep.subr.bf16.mxu0 0
        %594 = vmatpush1.bf16.msra.mxu0 0
        %595 = vmatprep.subr.bf16.mxu0 0
        %596 = vmatpush1.bf16.msra.mxu0 0
        %597 = vmatprep.subr.bf16.mxu0 0
        %598 = vmatpush1.bf16.msra.mxu0 0
        %599 = vmatprep.subr.bf16.mxu0 0
        %600 = vmatpush1.bf16.msra.mxu0 0
        %601 = vmatprep.subr.bf16.mxu0 0
        %602 = vmatpush1.bf16.msra.mxu0 0
        %603 = vmatprep.subr.bf16.mxu0 0
        %604 = vmatpush1.bf16.msra.mxu0 0
        %605 = vmatprep.subr.bf16.mxu0 0
        %606 = vmatpush1.bf16.msra.mxu0 0
        %607 = vmatprep.mubr.bf16.mxu0 0
        %608 = vmatmul.mubr.bf16.gmra.mrb[0].mxu0 %v503
        %v609 = vpop.f32.mrb[0].mxu0
        %v610 = vadd.f32 %v525, %v609
        %v611 = vpop.f32.mrb[0].mxu0
        %v612 = vpop.f32.mrb[0].mxu0
        %v613 = vadd.f32 %v525, %v612
        %v614 = vpop.f32.mrb[0].mxu0
        %615 = vdwg.mxu0
        %v616 = vmax.f32 %v610, 0.0
        %v617 = vmax.f32 %v613, 0.0
        %v618 = vpack.c.bf16 %v617, %v616
        %v619 = vld [vmem:[#allocation6] sm:$0xf]
        %v620 = vld [vmem:[#allocation6 + $0x4] sm:$0xf]
        %v621 = vld [vmem:[#allocation6 + $0x8] sm:$0xf]
        %v622 = vld [vmem:[#allocation6 + $0xc] sm:$0xf]
        %v623 = vld [vmem:[#allocation6 + $0x10] sm:$0xf]
        %v624 = vld [vmem:[#allocation6 + $0x14] sm:$0xf]
        %v625 = vld [vmem:[#allocation6 + $0x18] sm:$0xf]
        %v626 = vld [vmem:[#allocation6 + $0x1c] sm:$0xf]
        %v627 = vld [vmem:[#allocation6 + $0x20] sm:$0xf]
        %v628 = vld [vmem:[#allocation6 + $0x24] sm:$0xf]
        %v629 = vld [vmem:[#allocation6 + $0x28] sm:$0xf]
        %v630 = vld [vmem:[#allocation6 + $0x2c] sm:$0xf]
        %v631 = vld [vmem:[#allocation6 + $0x30] sm:$0xf]
        %v632 = vld [vmem:[#allocation6 + $0x34] sm:$0xf]
        %v633 = vld [vmem:[#allocation6 + $0x38] sm:$0xf]
        %v634 = vld [vmem:[#allocation6 + $0x3c] sm:$0xf]
        %v635 = vld [vmem:[%s6] sm:$0x1]
        %v637 = vlaneseq
        %v638 = vshrl.u32 %v637, 7
        %v639 = vsub.s32 0, %v638
        %v640 = vrot.slane %v635, %v639
        %v658 = vunpack.c.l.b16 %v619
        %v659 = vunpack.c.l.b16 %v620
        %v660 = vunpack.c.l.b16 %v621
        %v661 = vunpack.c.l.b16 %v622
        %v662 = vunpack.c.l.b16 %v623
        %v663 = vunpack.c.l.b16 %v624
        %v664 = vunpack.c.l.b16 %v625
        %v665 = vunpack.c.l.b16 %v626
        %v666 = vunpack.c.l.b16 %v627
        %v667 = vunpack.c.l.b16 %v628
        %v668 = vunpack.c.l.b16 %v629
        %v669 = vunpack.c.l.b16 %v630
        %v670 = vunpack.c.l.b16 %v631
        %v671 = vunpack.c.l.b16 %v632
        %v672 = vunpack.c.l.b16 %v633
        %v673 = vunpack.c.l.b16 %v634
        %v674 = vpack.c.b16 %v659, %v658
        %v675 = vpack.c.b16 %v661, %v660
        %v676 = vpack.c.b16 %v663, %v662
        %v677 = vpack.c.b16 %v665, %v664
        %v678 = vpack.c.b16 %v667, %v666
        %v679 = vpack.c.b16 %v669, %v668
        %v680 = vpack.c.b16 %v671, %v670
        %v681 = vpack.c.b16 %v673, %v672
        %690 = vmatprep.subr.bf16.mxu0 0
        %691 = vmatpush1.bf16.msra.mxu0 %v674
        %692 = vmatprep.subr.bf16.mxu0 0
        %693 = vmatpush1.bf16.msra.mxu0 %v675
        %694 = vmatprep.subr.bf16.mxu0 0
        %695 = vmatpush1.bf16.msra.mxu0 %v676
        %696 = vmatprep.subr.bf16.mxu0 0
        %697 = vmatpush1.bf16.msra.mxu0 %v677
        %698 = vmatprep.subr.bf16.mxu0 0
        %699 = vmatpush1.bf16.msra.mxu0 %v678
        %700 = vmatprep.subr.bf16.mxu0 0
        %701 = vmatpush1.bf16.msra.mxu0 %v679
        %702 = vmatprep.subr.bf16.mxu0 0
        %703 = vmatpush1.bf16.msra.mxu0 %v680
        %704 = vmatprep.subr.bf16.mxu0 0
        %705 = vmatpush1.bf16.msra.mxu0 %v681
        %706 = vmatprep.subr.bf16.mxu0 0
        %707 = vmatpush1.bf16.msra.mxu0 0
        %708 = vmatprep.subr.bf16.mxu0 0
        %709 = vmatpush1.bf16.msra.mxu0 0
        %710 = vmatprep.subr.bf16.mxu0 0
        %711 = vmatpush1.bf16.msra.mxu0 0
        %712 = vmatprep.subr.bf16.mxu0 0
        %713 = vmatpush1.bf16.msra.mxu0 0
        %714 = vmatprep.subr.bf16.mxu0 0
        %715 = vmatpush1.bf16.msra.mxu0 0
        %716 = vmatprep.subr.bf16.mxu0 0
        %717 = vmatpush1.bf16.msra.mxu0 0
        %718 = vmatprep.subr.bf16.mxu0 0
        %719 = vmatpush1.bf16.msra.mxu0 0
        %720 = vmatprep.subr.bf16.mxu0 0
        %721 = vmatpush1.bf16.msra.mxu0 0
        %722 = vmatprep.mubr.bf16.mxu0 0
        %723 = vmatmul.mubr.bf16.gmra.mrb[0].mxu0 %v618
        %v724 = vpop.f32.mrb[0].mxu0
        %v725 = vadd.f32 %v640, %v724
        %v726 = vpop.f32.mrb[0].mxu0
        %v727 = vpop.f32.mrb[0].mxu0
        %v728 = vadd.f32 %v640, %v727
        %v729 = vpop.f32.mrb[0].mxu0
        %730 = vdwg.mxu0
        %v731 = vmax.f32 %v725, 0.0
        %v732 = vmax.f32 %v728, 0.0
        %v733 = vpack.c.bf16 %v732, %v731
        %v734 = vld [vmem:[%s7] sm:$0xf]
        %v735 = vld [vmem:[%s7 + $0x4] sm:$0xf]
        %v736 = vld [vmem:[%s7 + $0x8] sm:$0xf]
        %v737 = vld [vmem:[%s7 + $0xc] sm:$0xf]
        %v738 = vld [vmem:[%s7 + $0x10] sm:$0xf]
        %v739 = vld [vmem:[%s7 + $0x14] sm:$0xf]
        %v740 = vld [vmem:[%s7 + $0x18] sm:$0xf]
        %v741 = vld [vmem:[%s7 + $0x1c] sm:$0xf]
        %v742 = vld [vmem:[%s7 + $0x20] sm:$0xf]
        %v743 = vld [vmem:[%s7 + $0x24] sm:$0xf]
        %v744 = vld [vmem:[%s7 + $0x28] sm:$0xf]
        %v745 = vld [vmem:[%s7 + $0x2c] sm:$0xf]
        %v746 = vld [vmem:[%s7 + $0x30] sm:$0xf]
        %v747 = vld [vmem:[%s7 + $0x34] sm:$0xf]
        %v748 = vld [vmem:[%s7 + $0x38] sm:$0xf]
        %v749 = vld [vmem:[%s7 + $0x3c] sm:$0xf]
        %v750 = vld [vmem:[%s8] sm:$0x1]
        %v752 = vlaneseq
        %v753 = vshrl.u32 %v752, 7
        %v754 = vsub.s32 0, %v753
        %v755 = vrot.slane %v750, %v754
        %v773 = vunpack.c.l.b16 %v734
        %v774 = vunpack.c.l.b16 %v735
        %v775 = vunpack.c.l.b16 %v736
        %v776 = vunpack.c.l.b16 %v737
        %v777 = vunpack.c.l.b16 %v738
        %v778 = vunpack.c.l.b16 %v739
        %v779 = vunpack.c.l.b16 %v740
        %v780 = vunpack.c.l.b16 %v741
        %v781 = vunpack.c.l.b16 %v742
        %v782 = vunpack.c.l.b16 %v743
        %v783 = vunpack.c.l.b16 %v744
        %v784 = vunpack.c.l.b16 %v745
        %v785 = vunpack.c.l.b16 %v746
        %v786 = vunpack.c.l.b16 %v747
        %v787 = vunpack.c.l.b16 %v748
        %v788 = vunpack.c.l.b16 %v749
        %v789 = vpack.c.b16 %v774, %v773
        %v790 = vpack.c.b16 %v776, %v775
        %v791 = vpack.c.b16 %v778, %v777
        %v792 = vpack.c.b16 %v780, %v779
        %v793 = vpack.c.b16 %v782, %v781
        %v794 = vpack.c.b16 %v784, %v783
        %v795 = vpack.c.b16 %v786, %v785
        %v796 = vpack.c.b16 %v788, %v787
        %805 = vmatprep.subr.bf16.mxu0 0
        %806 = vmatpush1.bf16.msra.mxu0 %v789
        %807 = vmatprep.subr.bf16.mxu0 0
        %808 = vmatpush1.bf16.msra.mxu0 %v790
        %809 = vmatprep.subr.bf16.mxu0 0
        %810 = vmatpush1.bf16.msra.mxu0 %v791
        %811 = vmatprep.subr.bf16.mxu0 0
        %812 = vmatpush1.bf16.msra.mxu0 %v792
        %813 = vmatprep.subr.bf16.mxu0 0
        %814 = vmatpush1.bf16.msra.mxu0 %v793
        %815 = vmatprep.subr.bf16.mxu0 0
        %816 = vmatpush1.bf16.msra.mxu0 %v794
        %817 = vmatprep.subr.bf16.mxu0 0
        %818 = vmatpush1.bf16.msra.mxu0 %v795
        %819 = vmatprep.subr.bf16.mxu0 0
        %820 = vmatpush1.bf16.msra.mxu0 %v796
        %821 = vmatprep.subr.bf16.mxu0 0
        %822 = vmatpush1.bf16.msra.mxu0 0
        %823 = vmatprep.subr.bf16.mxu0 0
        %824 = vmatpush1.bf16.msra.mxu0 0
        %825 = vmatprep.subr.bf16.mxu0 0
        %826 = vmatpush1.bf16.msra.mxu0 0
        %827 = vmatprep.subr.bf16.mxu0 0
        %828 = vmatpush1.bf16.msra.mxu0 0
        %829 = vmatprep.subr.bf16.mxu0 0
        %830 = vmatpush1.bf16.msra.mxu0 0
        %831 = vmatprep.subr.bf16.mxu0 0
        %832 = vmatpush1.bf16.msra.mxu0 0
        %833 = vmatprep.subr.bf16.mxu0 0
        %834 = vmatpush1.bf16.msra.mxu0 0
        %835 = vmatprep.subr.bf16.mxu0 0
        %836 = vmatpush1.bf16.msra.mxu0 0
        %837 = vmatprep.mubr.bf16.mxu0 0
        %838 = vmatmul.mubr.bf16.gmra.mrb[0].mxu0 %v733
        %v839 = vpop.f32.mrb[0].mxu0
        %v840 = vadd.f32 %v755, %v839
        %v841 = vpop.f32.mrb[0].mxu0
        %v842 = vpop.f32.mrb[0].mxu0
        %v843 = vadd.f32 %v755, %v842
        %v844 = vpop.f32.mrb[0].mxu0
        %845 = vdwg.mxu0
        %v846 = vxor.u32 %v840, 2147483648
        %v847 = vxor.u32 %v843, 2147483648
        %v848 = vmul.f32 %v846, 1.442695
        %v849 = vpow.pop %v848
        %v850 = vmul.f32 %v847, 1.442695
        %v851 = vpow.pop %v850
        %v852 = vadd.f32 %v849, 1.0
        %v853 = vadd.f32 %v851, 1.0
        %v854 = vrcp.pop %v852
        %v855 = vmul.f32 1.0, %v854
        %v856 = vrcp.pop %v853
        %v857 = vmul.f32 1.0, %v856
        %v858 = vpack.c.bf16 %v857, %v855
        %v860 = vunpack.c.l.b16 %v858
        %v861 = vunpack.c.h.b16 %v858
        %v862 = vpack.c.b16 %v860, %v860
        %v863 = vpack.c.b16 %v861, %v861
        %866 = vst [vmem:[%s378] sm:$0xf] %v862
        %867 = vst [vmem:[%s378 + $0x4] sm:$0xf] %v863
        %s868 = smul.u32 2, %s22
        %p869 = scmp.lt.s32.totalorder %s868, 3
        %s870 = scalar_select %p869, %s868, 3
        %s871 = smul.addr %s870, 4
        %s872 = scalar_lea.vmem %s9, %s871
        // Predicated region
        $region69: #{deep_relu_forward.1} parent=55 // pred_check
          %p873 = pneg %p234
        $region70: #{deep_relu_forward.1} parent=55 // pred_check_branch
          %875 = sbr.rel (%p873) target = $region72
        $region71: #{deep_relu_forward.1} parent=55 // pred_region
          %s876 = smul.u32 2, %s22
        $region72: #{deep_relu_forward.1} parent=55 // pred_fallthru
          _
      $region56: #{deep_relu_forward.1} parent=5 // pred_fallthru
        _
      %p877 = scmp.le.s32.totalorder 2, %s17
      // Predicated region
      $region73: #{deep_relu_forward.1} parent=5 // pred_check
        %p878 = pneg %p877
      $region74: #{deep_relu_forward.1} parent=5 // pred_check_branch
        %880 = sbr.rel (%p878) target = $region76
      $region75: #{deep_relu_forward.1} parent=5 // pred_region
        %s881 = ssub.s32 %s17, 2
        // Predicated region
        $region77: #{deep_relu_forward.1} parent=75 // pred_check
          %p882 = pneg %p240
        $region78: #{deep_relu_forward.1} parent=75 // pred_check_branch
          %884 = sbr.rel (%p882) target = $region80
        $region79: #{deep_relu_forward.1} parent=75 // pred_region
          %s885 = smul.u32 2, %s23
          %p886 = scmp.lt.s32.totalorder %s885, 3
          %s887 = scalar_select %p886, %s885, 3
          %s888 = smul.addr %s887, 4
          %s889 = scalar_lea.vmem %s9, %s888
        $region80: #{deep_relu_forward.1} parent=75 // pred_fallthru
          _
      $region76: #{deep_relu_forward.1} parent=5 // pred_fallthru
        _
    $region6: #{deep_relu_forward.1} parent=1 // loop_footer
      %s21 = sadd.s32 1, %s17
    $region7: #{deep_relu_forward.1} parent=1 // loop_footer_branch
      %16 = sbr.rel target = $region3
    $region8: #{deep_relu_forward.1} parent=1 // loop_exit
      _
    %890 = vsyncpa [#allocation3], 1
    %s891 = scalar_lea.sflag [#allocation3], 1
    %892 = vsyncpa %s891, 1
    %893 = vsyncpa [#allocation5], 1

// kernel: deep_relu_forward.1
$region0: #{deep_relu_forward.1}
  #allocation0 [shape = 'u32[]', space=smem, size = 0x4, offset = 0x4, fixed_abs, tag = 'smem constant byte address 0x4 - core index']
  #allocation1 [shape = 'u32[144,128]{1,0:T(1,128)}', space=vmem, size = 0x12000, scoped, tag = 'internal scratch']
  %s0 = inlined_call_operand.vmem [shape: bf16[32,128], index: 0, kind: input, shape index: {}]
  %s1 = inlined_call_operand.hbm [shape: bf16[128,128], index: 1, kind: input, shape index: {}]
  %s2 = inlined_call_operand.vmem [shape: f32[1,128], index: 2, kind: input, shape index: {}]
  %s3 = inlined_call_operand.hbm [shape: bf16[128,128], index: 3, kind: input, shape index: {}]
  %s4 = inlined_call_operand.vmem [shape: f32[1,128], index: 4, kind: input, shape index: {}]
  %s5 = inlined_call_operand.hbm [shape: bf16[128,128], index: 5, kind: input, shape index: {}]
  %s6 = inlined_call_operand.vmem [shape: f32[1,128], index: 6, kind: input, shape index: {}]
  %s7 = inlined_call_operand.vmem [shape: bf16[128,128], index: 7, kind: input, shape index: {}]
  %s8 = inlined_call_operand.vmem [shape: f32[1,128], index: 8, kind: input, shape index: {}]
  %s9 = inlined_call_operand.vmem [shape: bf16[32,128], index: 9, kind: output, shape index: {}]
  %s10 = sld [smem:[#allocation0]]
  $region81: #{deep_relu_forward.1} parent=0
    _
  %s12 = ssub.s32 1, %s10
  %s13 = scalar_select 0, %s12, %s10
  $region1: #{deep_relu_forward.1} parent=0
    #allocation2 [shape = 'u8[32768]{0}', space=vmem, size = 0x8000, scoped, tag = 'input window, operand 1, single buffered']
    #allocation3 [shape = 's32[2]{0}', space=sflag, size = 0x8, scoped, tag = 'scoped memory for deep_relu_forward.1']
    #allocation4 [shape = 'u8[32768]{0}', space=vmem, size = 0x8000, scoped, tag = 'input window, operand 3, single buffered']
    #allocation5 [shape = 's32[1]{0}', space=sflag, size = 0x4, scoped, tag = 'scoped memory for deep_relu_forward.1']
    #allocation6 [shape = 'u8[32768]{0}', space=vmem, size = 0x8000, scoped, tag = 'input window, operand 5, single buffered']
    %14 = vsyncpa [#allocation3], 0
    %15 = vsyncpa [#allocation5], 0
    loop: start=0, step=1, limit=4
    $region2: #{deep_relu_forward.1} parent=1 // loop_pre_header
      _
    $region3: #{deep_relu_forward.1} parent=1 // loop_header
      %s17 = sphi 0, %s21
      %p18 = scmp.ge.s32.totalorder %s17, 4
      %s27 = sphi 0, %s29
      %s30 = sphi 0, %s27
      %s31 = sphi 0, %s30
      %s47 = sphi 0, %s31
      %s51 = sphi 0, %s51
      %s53 = sphi 0, %s51
      %s54 = sphi 0, %s53
      %s68 = sphi 0, %s54
      %s72 = sphi 0, %s72
      %s74 = sphi 0, %s72
      %s75 = sphi 0, %s74
      %s89 = sphi 0, %s75
      %s93 = sphi 0, %s93
      %s95 = sphi 0, %s93
      %s96 = sphi 0, %s95
      %s110 = sphi 0, %s96
      %s114 = sphi 0, %s114
      %s116 = sphi 0, %s114
      %s117 = sphi 0, %s116
      %s131 = sphi 0, %s117
      %s135 = sphi 0, %s135
      %s137 = sphi 0, %s135
      %s138 = sphi 0, %s137
      %s152 = sphi 0, %s138
      %s156 = sphi 0, %s156
      %s158 = sphi 0, %s156
      %s159 = sphi 0, %s158
      %s173 = sphi 0, %s159
      %s177 = sphi 0, %s177
      %s179 = sphi 0, %s177
      %s180 = sphi 0, %s179
      %s194 = sphi 0, %s180
      %s198 = sphi 0, %s198
      %s200 = sphi 0, %s198
      %s201 = sphi 0, %s200
      %s215 = sphi 0, %s201
      %s221 = sphi 0, %s223
      %s224 = sphi 0, %s221
      %s225 = sphi 0, %s224
      %s241 = sphi 0, %s225
    $region4: #{deep_relu_forward.1} parent=1 // loop_header_branch
      %20 = sbr.rel (%p18) target = $region8
    $region5: #{deep_relu_forward.1} parent=1 // loop_body
      %s22 = ssub.s32 %s17, 1
      %s23 = ssub.s32 %s17, 2
      %s24 = sadd.s32 %s17, 1
      %s25 = ssub.s32 %s17, %s24
      %p26 = scmp.eq.s32.totalorder %s25, 0
      %s28 = sadd.s32 %s27, 1
      %s29 = scalar_select %p26, %s27, %s28
      %p32 = pneg %p26
      %p33 = scmp.eq.s32.totalorder %s17, 1
      %p34 = por %p32, %p33
      %p35 = scmp.ne.s32.totalorder %s27, %s30
      %p36 = scmp.eq.s32.totalorder %s17, 0
      %p37 = por %p35, %p36
      %p38 = scmp.ne.s32.totalorder %s27, %s30
      %p39 = scmp.eq.s32.totalorder %s22, 1
      %p40 = por %p38, %p39
      %p41 = scmp.ne.s32.totalorder %s30, %s31
      %p42 = scmp.eq.s32.totalorder %s22, 0
      %p43 = por %p41, %p42
      %p44 = scmp.ne.s32.totalorder %s30, %s31
      %p45 = scmp.eq.s32.totalorder %s23, 1
      %p46 = por %p44, %p45
      %p48 = scmp.ne.s32.totalorder %s31, %s47
      %p49 = scmp.eq.s32.totalorder %s23, 0
      %p50 = por %p48, %p49
      %s52 = sadd.s32 %s51, 1
      %p55 = scmp.eq.s32.totalorder %s17, 1
      %p56 = scmp.ne.s32.totalorder %s51, %s53
      %p57 = scmp.eq.s32.totalorder %s17, 0
      %p58 = por %p56, %p57
      %p59 = scmp.ne.s32.totalorder %s51, %s53
      %p60 = scmp.eq.s32.totalorder %s22, 1
      %p61 = por %p59, %p60
      %p62 = scmp.ne.s32.totalorder %s53, %s54
      %p63 = scmp.eq.s32.totalorder %s22, 0
      %p64 = por %p62, %p63
      %p65 = scmp.ne.s32.totalorder %s53, %s54
      %p66 = scmp.eq.s32.totalorder %s23, 1
      %p67 = por %p65, %p66
      %p69 = scmp.ne.s32.totalorder %s54, %s68
      %p70 = scmp.eq.s32.totalorder %s23, 0
      %p71 = por %p69, %p70
      %s73 = sadd.s32 %s72, 1
      %p76 = scmp.eq.s32.totalorder %s17, 1
      %p77 = scmp.ne.s32.totalorder %s72, %s74
      %p78 = scmp.eq.s32.totalorder %s17, 0
      %p79 = por %p77, %p78
      %p80 = scmp.ne.s32.totalorder %s72, %s74
      %p81 = scmp.eq.s32.totalorder %s22, 1
      %p82 = por %p80, %p81
      %p83 = scmp.ne.s32.totalorder %s74, %s75
      %p84 = scmp.eq.s32.totalorder %s22, 0
      %p85 = por %p83, %p84
      %p86 = scmp.ne.s32.totalorder %s74, %s75
      %p87 = scmp.eq.s32.totalorder %s23, 1
      %p88 = por %p86, %p87
      %p90 = scmp.ne.s32.totalorder %s75, %s89
      %p91 = scmp.eq.s32.totalorder %s23, 0
      %p92 = por %p90, %p91
      %s94 = sadd.s32 %s93, 1
      %p97 = scmp.eq.s32.totalorder %s17, 1
      %p98 = scmp.ne.s32.totalorder %s93, %s95
      %p99 = scmp.eq.s32.totalorder %s17, 0
      %p100 = por %p98, %p99
      %p101 = scmp.ne.s32.totalorder %s93, %s95
      %p102 = scmp.eq.s32.totalorder %s22, 1
      %p103 = por %p101, %p102
      %p104 = scmp.ne.s32.totalorder %s95, %s96
      %p105 = scmp.eq.s32.totalorder %s22, 0
      %p106 = por %p104, %p105
      %p107 = scmp.ne.s32.totalorder %s95, %s96
      %p108 = scmp.eq.s32.totalorder %s23, 1
      %p109 = por %p107, %p108
      %p111 = scmp.ne.s32.totalorder %s96, %s110
      %p112 = scmp.eq.s32.totalorder %s23, 0
      %p113 = por %p111, %p112
      %s115 = sadd.s32 %s114, 1
      %p118 = scmp.eq.s32.totalorder %s17, 1
      %p119 = scmp.ne.s32.totalorder %s114, %s116
      %p120 = scmp.eq.s32.totalorder %s17, 0
      %p121 = por %p119, %p120
      %p122 = scmp.ne.s32.totalorder %s114, %s116
      %p123 = scmp.eq.s32.totalorder %s22, 1
      %p124 = por %p122, %p123
      %p125 = scmp.ne.s32.totalorder %s116, %s117
      %p126 = scmp.eq.s32.totalorder %s22, 0
      %p127 = por %p125, %p126
      %p128 = scmp.ne.s32.totalorder %s116, %s117
      %p129 = scmp.eq.s32.totalorder %s23, 1
      %p130 = por %p128, %p129
      %p132 = scmp.ne.s32.totalorder %s117, %s131
      %p133 = scmp.eq.s32.totalorder %s23, 0
      %p134 = por %p132, %p133
      %s136 = sadd.s32 %s135, 1
      %p139 = scmp.eq.s32.totalorder %s17, 1
      %p140 = scmp.ne.s32.totalorder %s135, %s137
      %p141 = scmp.eq.s32.totalorder %s17, 0
      %p142 = por %p140, %p141
      %p143 = scmp.ne.s32.totalorder %s135, %s137
      %p144 = scmp.eq.s32.totalorder %s22, 1
      %p145 = por %p143, %p144
      %p146 = scmp.ne.s32.totalorder %s137, %s138
      %p147 = scmp.eq.s32.totalorder %s22, 0
      %p148 = por %p146, %p147
      %p149 = scmp.ne.s32.totalorder %s137, %s138
      %p150 = scmp.eq.s32.totalorder %s23, 1
      %p151 = por %p149, %p150
      %p153 = scmp.ne.s32.totalorder %s138, %s152
      %p154 = scmp.eq.s32.totalorder %s23, 0
      %p155 = por %p153, %p154
      %s157 = sadd.s32 %s156, 1
      %p160 = scmp.eq.s32.totalorder %s17, 1
      %p161 = scmp.ne.s32.totalorder %s156, %s158
      %p162 = scmp.eq.s32.totalorder %s17, 0
      %p163 = por %p161, %p162
      %p164 = scmp.ne.s32.totalorder %s156, %s158
      %p165 = scmp.eq.s32.totalorder %s22, 1
      %p166 = por %p164, %p165
      %p167 = scmp.ne.s32.totalorder %s158, %s159
      %p168 = scmp.eq.s32.totalorder %s22, 0
      %p169 = por %p167, %p168
      %p170 = scmp.ne.s32.totalorder %s158, %s159
      %p171 = scmp.eq.s32.totalorder %s23, 1
      %p172 = por %p170, %p171
      %p174 = scmp.ne.s32.totalorder %s159, %s173
      %p175 = scmp.eq.s32.totalorder %s23, 0
      %p176 = por %p174, %p175
      %s178 = sadd.s32 %s177, 1
      %p181 = scmp.eq.s32.totalorder %s17, 1
      %p182 = scmp.ne.s32.totalorder %s177, %s179
      %p183 = scmp.eq.s32.totalorder %s17, 0
      %p184 = por %p182, %p183
      %p185 = scmp.ne.s32.totalorder %s177, %s179
      %p186 = scmp.eq.s32.totalorder %s22, 1
      %p187 = por %p185, %p186
      %p188 = scmp.ne.s32.totalorder %s179, %s180
      %p189 = scmp.eq.s32.totalorder %s22, 0
      %p190 = por %p188, %p189
      %p191 = scmp.ne.s32.totalorder %s179, %s180
      %p192 = scmp.eq.s32.totalorder %s23, 1
      %p193 = por %p191, %p192
      %p195 = scmp.ne.s32.totalorder %s180, %s194
      %p196 = scmp.eq.s32.totalorder %s23, 0
      %p197 = por %p195, %p196
      %s199 = sadd.s32 %s198, 1
      %p202 = scmp.eq.s32.totalorder %s17, 1
      %p203 = scmp.ne.s32.totalorder %s198, %s200
      %p204 = scmp.eq.s32.totalorder %s17, 0
      %p205 = por %p203, %p204
      %p206 = scmp.ne.s32.totalorder %s198, %s200
      %p207 = scmp.eq.s32.totalorder %s22, 1
      %p208 = por %p206, %p207
      %p209 = scmp.ne.s32.totalorder %s200, %s201
      %p210 = scmp.eq.s32.totalorder %s22, 0
      %p211 = por %p209, %p210
      %p212 = scmp.ne.s32.totalorder %s200, %s201
      %p213 = scmp.eq.s32.totalorder %s23, 1
      %p214 = por %p212, %p213
      %p216 = scmp.ne.s32.totalorder %s201, %s215
      %p217 = scmp.eq.s32.totalorder %s23, 0
      %p218 = por %p216, %p217
      %s219 = ssub.s32 %s17, %s24
      %p220 = scmp.eq.s32.totalorder %s219, 0
      %s222 = sadd.s32 %s221, 1
      %s223 = scalar_select %p220, %s221, %s222
      %p226 = pneg %p220
      %p227 = scmp.eq.s32.totalorder %s17, 1
      %p228 = por %p226, %p227
      %p229 = scmp.ne.s32.totalorder %s221, %s224
      %p230 = scmp.eq.s32.totalorder %s17, 0
      %p231 = por %p229, %p230
      %p232 = scmp.ne.s32.totalorder %s221, %s224
      %p233 = scmp.eq.s32.totalorder %s22, 1
      %p234 = por %p232, %p233
      %p235 = scmp.ne.s32.totalorder %s224, %s225
      %p236 = scmp.eq.s32.totalorder %s22, 0
      %p237 = por %p235, %p236
      %p238 = scmp.ne.s32.totalorder %s224, %s225
      %p239 = scmp.eq.s32.totalorder %s23, 1
      %p240 = por %p238, %p239
      %p242 = scmp.ne.s32.totalorder %s225, %s241
      %p243 = scmp.eq.s32.totalorder %s23, 0
      %p244 = por %p242, %p243
      %p245 = scmp.le.s32.totalorder 1, %s17
      %p246 = scmp.lt.s32.totalorder %s17, 3
      %p247 = pnand %p245, %p246
      %p248 = pneg %p247
      // Predicated region
      $region9: #{deep_relu_forward.1} parent=5 // pred_check
        _
      $region10: #{deep_relu_forward.1} parent=5 // pred_check_branch
        %250 = sbr.rel (%p247) target = $region12
      $region11: #{deep_relu_forward.1} parent=5 // pred_region
        %s251 = ssub.s32 %s17, 1
        // Predicated region
        $region13: #{deep_relu_forward.1} parent=11 // pred_check
          %p252 = pneg %p64
        $region14: #{deep_relu_forward.1} parent=11 // pred_check_branch
          %254 = sbr.rel (%p252) target = $region16
        $region15: #{deep_relu_forward.1} parent=11 // pred_region
          %s256 = ssub.s32 1024, 1024
          %257 = vsyncadd [#allocation3], %s256
          %s258 = sshll.u32 [#allocation2], 4
          %s259 = int_to_ptr.vmem [resolvable:$true] %s258
          %264 = dma.hbm_to_vmem [thread:$0]  %s1, 1024, %s259, [#allocation3], 64, 64, 4
        $region16: #{deep_relu_forward.1} parent=11 // pred_fallthru
          _
        // Predicated region
        $region17: #{deep_relu_forward.1} parent=11 // pred_check
          %p265 = pneg %p85
        $region18: #{deep_relu_forward.1} parent=11 // pred_check_branch
          %267 = sbr.rel (%p265) target = $region20
        $region19: #{deep_relu_forward.1} parent=11 // pred_region
          _
        $region20: #{deep_relu_forward.1} parent=11 // pred_fallthru
          _
        // Predicated region
        $region21: #{deep_relu_forward.1} parent=11 // pred_check
          %p268 = pneg %p106
        $region22: #{deep_relu_forward.1} parent=11 // pred_check_branch
          %270 = sbr.rel (%p268) target = $region24
        $region23: #{deep_relu_forward.1} parent=11 // pred_region
          %s272 = ssub.s32 1024, 1024
          %273 = vsyncadd [#allocation5], %s272
          %s274 = sshll.u32 [#allocation4], 4
          %s275 = int_to_ptr.vmem [resolvable:$true] %s274
          %280 = dma.hbm_to_vmem [thread:$0]  %s3, 1024, %s275, [#allocation5], 64, 64, 4
        $region24: #{deep_relu_forward.1} parent=11 // pred_fallthru
          _
        // Predicated region
        $region25: #{deep_relu_forward.1} parent=11 // pred_check
          %p281 = pneg %p127
        $region26: #{deep_relu_forward.1} parent=11 // pred_check_branch
          %283 = sbr.rel (%p281) target = $region28
        $region27: #{deep_relu_forward.1} parent=11 // pred_region
          _
        $region28: #{deep_relu_forward.1} parent=11 // pred_fallthru
          _
        // Predicated region
        $region29: #{deep_relu_forward.1} parent=11 // pred_check
          %p284 = pneg %p148
        $region30: #{deep_relu_forward.1} parent=11 // pred_check_branch
          %286 = sbr.rel (%p284) target = $region32
        $region31: #{deep_relu_forward.1} parent=11 // pred_region
          %s288 = ssub.s32 1024, 1024
          %289 = vsyncadd [#allocation5], %s288
          %s290 = sshll.u32 [#allocation6], 4
          %s291 = int_to_ptr.vmem [resolvable:$true] %s290
          %296 = dma.hbm_to_vmem [thread:$0]  %s5, 1024, %s291, [#allocation5], 64, 64, 4
        $region32: #{deep_relu_forward.1} parent=11 // pred_fallthru
          _
        // Predicated region
        $region33: #{deep_relu_forward.1} parent=11 // pred_check
          %p297 = pneg %p169
        $region34: #{deep_relu_forward.1} parent=11 // pred_check_branch
          %299 = sbr.rel (%p297) target = $region36
        $region35: #{deep_relu_forward.1} parent=11 // pred_region
          _
        $region36: #{deep_relu_forward.1} parent=11 // pred_fallthru
          _
        // Predicated region
        $region37: #{deep_relu_forward.1} parent=11 // pred_check
          %p300 = pneg %p190
        $region38: #{deep_relu_forward.1} parent=11 // pred_check_branch
          %302 = sbr.rel (%p300) target = $region40
        $region39: #{deep_relu_forward.1} parent=11 // pred_region
          _
        $region40: #{deep_relu_forward.1} parent=11 // pred_fallthru
          _
        // Predicated region
        $region41: #{deep_relu_forward.1} parent=11 // pred_check
          %p303 = pneg %p211
        $region42: #{deep_relu_forward.1} parent=11 // pred_check_branch
          %305 = sbr.rel (%p303) target = $region44
        $region43: #{deep_relu_forward.1} parent=11 // pred_region
          _
        $region44: #{deep_relu_forward.1} parent=11 // pred_fallthru
          _
      $region12: #{deep_relu_forward.1} parent=5 // pred_fallthru
        _
      %p306 = scmp.lt.s32.totalorder %s17, 2
      // Predicated region
      $region45: #{deep_relu_forward.1} parent=5 // pred_check
        %p307 = pneg %p306
      $region46: #{deep_relu_forward.1} parent=5 // pred_check_branch
        %309 = sbr.rel (%p307) target = $region48
      $region47: #{deep_relu_forward.1} parent=5 // pred_region
        // Predicated region
        $region49: #{deep_relu_forward.1} parent=47 // pred_check
          %p310 = pneg %p37
        $region50: #{deep_relu_forward.1} parent=47 // pred_check_branch
          %312 = sbr.rel (%p310) target = $region52
        $region51: #{deep_relu_forward.1} parent=47 // pred_region
          %s313 = smul.u32 2, %s17
          %p314 = scmp.lt.s32.totalorder %s313, 3
          %s315 = scalar_select %p314, %s313, 3
          %s316 = smul.addr %s315, 4
          %s317 = scalar_lea.vmem %s0, %s316
          %s318 = smul.u32 2, %s17
        $region52: #{deep_relu_forward.1} parent=47 // pred_fallthru
          _
      $region48: #{deep_relu_forward.1} parent=5 // pred_fallthru
        _
      %p319 = scmp.le.s32.totalorder 1, %s17
      %p320 = scmp.lt.s32.totalorder %s17, 3
      %p321 = pnand %p319, %p320
      %p322 = pneg %p321
      // Predicated region
      $region53: #{deep_relu_forward.1} parent=5 // pred_check
        _
      $region54: #{deep_relu_forward.1} parent=5 // pred_check_branch
        %324 = sbr.rel (%p321) target = $region56
      $region55: #{deep_relu_forward.1} parent=5 // pred_region
        %s325 = ssub.s32 %s17, 1
        // Predicated region
        $region57: #{deep_relu_forward.1} parent=55 // pred_check
          %p326 = pneg %p64
        $region58: #{deep_relu_forward.1} parent=55 // pred_check_branch
          %328 = sbr.rel (%p326) target = $region60
        $region59: #{deep_relu_forward.1} parent=55 // pred_region
          %329 = dma.done [#allocation3], 1024
        $region60: #{deep_relu_forward.1} parent=55 // pred_fallthru
          _
        // Predicated region
        $region61: #{deep_relu_forward.1} parent=55 // pred_check
          %p330 = pneg %p106
        $region62: #{deep_relu_forward.1} parent=55 // pred_check_branch
          %332 = sbr.rel (%p330) target = $region64
        $region63: #{deep_relu_forward.1} parent=55 // pred_region
          %333 = dma.done [#allocation5], 1024
        $region64: #{deep_relu_forward.1} parent=55 // pred_fallthru
          _
        // Predicated region
        $region65: #{deep_relu_forward.1} parent=55 // pred_check
          %p334 = pneg %p148
        $region66: #{deep_relu_forward.1} parent=55 // pred_check_branch
          %336 = sbr.rel (%p334) target = $region68
        $region67: #{deep_relu_forward.1} parent=55 // pred_region
          %337 = dma.done [#allocation5], 1024
        $region68: #{deep_relu_forward.1} parent=55 // pred_fallthru
          _
        %s338 = smul.u32 2, %s22
        %p339 = scmp.lt.s32.totalorder %s338, 3
        %s340 = scalar_select %p339, %s338, 3
        %s341 = smul.addr %s340, 4
        %s342 = scalar_lea.vmem %s0, %s341
        %p343 = pneg %p43
        %p344 = pneg %p40
        %p345 = pneg %p64
        %p346 = pneg %p61
        %p347 = pneg %p85
        %p348 = pneg %p82
        %p349 = pneg %p106
        %p350 = pneg %p103
        %p351 = pneg %p127
        %p352 = pneg %p124
        %p353 = pneg %p148
        %p354 = pneg %p145
        %p355 = pneg %p169
        %p356 = pneg %p166
        %p357 = pneg %p190
        %p358 = pneg %p187
        %p359 = pneg %p211
        %p360 = pneg %p208
        %p361 = pneg %p237
        %p362 = pneg %p234
        %s363 = smul.u32 2, %s22
        %p364 = scmp.lt.s32.totalorder %s363, 3
        %s365 = scalar_select %p364, %s363, 3
        %s366 = smul.addr %s365, 4
        %s367 = scalar_lea.vmem %s9, %s366
        %s368 = smul.u32 2, %s22
        %p369 = scmp.lt.s32.totalorder %s368, 3
        %s370 = scalar_select %p369, %s368, 3
        %s371 = smul.addr %s370, 4
        %s372 = scalar_lea.vmem %s0, %s371
        %s373 = smul.u32 2, %s22
        %s374 = smul.u32 2, %s22
        %p375 = scmp.lt.s32.totalorder %s374, 3
        %s376 = scalar_select %p375, %s374, 3
        %s377 = smul.addr %s376, 4
        %s378 = scalar_lea.vmem %s9, %s377
        %s379 = smul.u32 2, %s22
        %v381 = vld [vmem:[%s372] sm:$0xf]
        %v382 = vld [vmem:[%s372 + $0x4] sm:$0xf]
        %v383 = vld [vmem:[#allocation2] sm:$0xf]
        %v384 = vld [vmem:[#allocation2 + $0x4] sm:$0xf]
        %v385 = vld [vmem:[#allocation2 + $0x8] sm:$0xf]
        %v386 = vld [vmem:[#allocation2 + $0xc] sm:$0xf]
        %v387 = vld [vmem:[#allocation2 + $0x10] sm:$0xf]
        %v388 = vld [vmem:[#allocation2 + $0x14] sm:$0xf]
        %v389 = vld [vmem:[#allocation2 + $0x18] sm:$0xf]
        %v390 = vld [vmem:[#allocation2 + $0x1c] sm:$0xf]
        %v391 = vld [vmem:[#allocation2 + $0x20] sm:$0xf]
        %v392 = vld [vmem:[#allocation2 + $0x24] sm:$0xf]
        %v393 = vld [vmem:[#allocation2 + $0x28] sm:$0xf]
        %v394 = vld [vmem:[#allocation2 + $0x2c] sm:$0xf]
        %v395 = vld [vmem:[#allocation2 + $0x30] sm:$0xf]
        %v396 = vld [vmem:[#allocation2 + $0x34] sm:$0xf]
        %v397 = vld [vmem:[#allocation2 + $0x38] sm:$0xf]
        %v398 = vld [vmem:[#allocation2 + $0x3c] sm:$0xf]
        %v399 = vld [vmem:[%s2] sm:$0x1]
        %v401 = vlaneseq
        %v402 = vshrl.u32 %v401, 7
        %v403 = vsub.s32 0, %v402
        %v404 = vrot.slane %v399, %v403
        %v408 = vunpack.c.l.b16 %v381
        %v409 = vunpack.c.l.b16 %v382
        %v410 = vpack.c.b16 %v409, %v408
        %v428 = vunpack.c.l.b16 %v383
        %v429 = vunpack.c.l.b16 %v384
        %v430 = vunpack.c.l.b16 %v385
        %v431 = vunpack.c.l.b16 %v386
        %v432 = vunpack.c.l.b16 %v387
        %v433 = vunpack.c.l.b16 %v388
        %v434 = vunpack.c.l.b16 %v389
        %v435 = vunpack.c.l.b16 %v390
        %v436 = vunpack.c.l.b16 %v391
        %v437 = vunpack.c.l.b16 %v392
        %v438 = vunpack.c.l.b16 %v393
        %v439 = vunpack.c.l.b16 %v394
        %v440 = vunpack.c.l.b16 %v395
        %v441 = vunpack.c.l.b16 %v396
        %v442 = vunpack.c.l.b16 %v397
        %v443 = vunpack.c.l.b16 %v398
        %v444 = vpack.c.b16 %v429, %v428
        %v445 = vpack.c.b16 %v431, %v430
        %v446 = vpack.c.b16 %v433, %v432
        %v447 = vpack.c.b16 %v435, %v434
        %v448 = vpack.c.b16 %v437, %v436
        %v449 = vpack.c.b16 %v439, %v438
        %v450 = vpack.c.b16 %v441, %v440
        %v451 = vpack.c.b16 %v443, %v442
        %460 = vmatprep.subr.bf16.mxu0 0
        %461 = vmatpush1.bf16.msra.mxu0 %v444
        %462 = vmatprep.subr.bf16.mxu0 0
        %463 = vmatpush1.bf16.msra.mxu0 %v445
        %464 = vmatprep.subr.bf16.mxu0 0
        %465 = vmatpush1.bf16.msra.mxu0 %v446
        %466 = vmatprep.subr.bf16.mxu0 0
        %467 = vmatpush1.bf16.msra.mxu0 %v447
        %468 = vmatprep.subr.bf16.mxu0 0
        %469 = vmatpush1.bf16.msra.mxu0 %v448
        %470 = vmatprep.subr.bf16.mxu0 0
        %471 = vmatpush1.bf16.msra.mxu0 %v449
        %472 = vmatprep.subr.bf16.mxu0 0
        %473 = vmatpush1.bf16.msra.mxu0 %v450
        %474 = vmatprep.subr.bf16.mxu0 0
        %475 = vmatpush1.bf16.msra.mxu0 %v451
        %476 = vmatprep.subr.bf16.mxu0 0
        %477 = vmatpush1.bf16.msra.mxu0 0
        %478 = vmatprep.subr.bf16.mxu0 0
        %479 = vmatpush1.bf16.msra.mxu0 0
        %480 = vmatprep.subr.bf16.mxu0 0
        %481 = vmatpush1.bf16.msra.mxu0 0
        %482 = vmatprep.subr.bf16.mxu0 0
        %483 = vmatpush1.bf16.msra.mxu0 0
        %484 = vmatprep.subr.bf16.mxu0 0
        %485 = vmatpush1.bf16.msra.mxu0 0
        %486 = vmatprep.subr.bf16.mxu0 0
        %487 = vmatpush1.bf16.msra.mxu0 0
        %488 = vmatprep.subr.bf16.mxu0 0
        %489 = vmatpush1.bf16.msra.mxu0 0
        %490 = vmatprep.subr.bf16.mxu0 0
        %491 = vmatpush1.bf16.msra.mxu0 0
        %492 = vmatprep.mubr.bf16.mxu0 0
        %493 = vmatmul.mubr.bf16.gmra.mrb[0].mxu0 %v410
        %v494 = vpop.f32.mrb[0].mxu0
        %v495 = vadd.f32 %v404, %v494
        %v496 = vpop.f32.mrb[0].mxu0
        %v497 = vpop.f32.mrb[0].mxu0
        %v498 = vadd.f32 %v404, %v497
        %v499 = vpop.f32.mrb[0].mxu0
        %500 = vdwg.mxu0
        %v501 = vmax.f32 %v495, 0.0
        %v502 = vmax.f32 %v498, 0.0
        %v503 = vpack.c.bf16 %v502, %v501
        %v504 = vld [vmem:[#allocation4] sm:$0xf]
        %v505 = vld [vmem:[#allocation4 + $0x4] sm:$0xf]
        %v506 = vld [vmem:[#allocation4 + $0x8] sm:$0xf]
        %v507 = vld [vmem:[#allocation4 + $0xc] sm:$0xf]
        %v508 = vld [vmem:[#allocation4 + $0x10] sm:$0xf]
        %v509 = vld [vmem:[#allocation4 + $0x14] sm:$0xf]
        %v510 = vld [vmem:[#allocation4 + $0x18] sm:$0xf]
        %v511 = vld [vmem:[#allocation4 + $0x1c] sm:$0xf]
        %v512 = vld [vmem:[#allocation4 + $0x20] sm:$0xf]
        %v513 = vld [vmem:[#allocation4 + $0x24] sm:$0xf]
        %v514 = vld [vmem:[#allocation4 + $0x28] sm:$0xf]
        %v515 = vld [vmem:[#allocation4 + $0x2c] sm:$0xf]
        %v516 = vld [vmem:[#allocation4 + $0x30] sm:$0xf]
        %v517 = vld [vmem:[#allocation4 + $0x34] sm:$0xf]
        %v518 = vld [vmem:[#allocation4 + $0x38] sm:$0xf]
        %v519 = vld [vmem:[#allocation4 + $0x3c] sm:$0xf]
        %v520 = vld [vmem:[%s4] sm:$0x1]
        %v522 = vlaneseq
        %v523 = vshrl.u32 %v522, 7
        %v524 = vsub.s32 0, %v523
        %v525 = vrot.slane %v520, %v524
        %v543 = vunpack.c.l.b16 %v504
        %v544 = vunpack.c.l.b16 %v505
        %v545 = vunpack.c.l.b16 %v506
        %v546 = vunpack.c.l.b16 %v507
        %v547 = vunpack.c.l.b16 %v508
        %v548 = vunpack.c.l.b16 %v509
        %v549 = vunpack.c.l.b16 %v510
        %v550 = vunpack.c.l.b16 %v511
        %v551 = vunpack.c.l.b16 %v512
        %v552 = vunpack.c.l.b16 %v513
        %v553 = vunpack.c.l.b16 %v514
        %v554 = vunpack.c.l.b16 %v515
        %v555 = vunpack.c.l.b16 %v516
        %v556 = vunpack.c.l.b16 %v517
        %v557 = vunpack.c.l.b16 %v518
        %v558 = vunpack.c.l.b16 %v519
        %v559 = vpack.c.b16 %v544, %v543
        %v560 = vpack.c.b16 %v546, %v545
        %v561 = vpack.c.b16 %v548, %v547
        %v562 = vpack.c.b16 %v550, %v549
        %v563 = vpack.c.b16 %v552, %v551
        %v564 = vpack.c.b16 %v554, %v553
        %v565 = vpack.c.b16 %v556, %v555
        %v566 = vpack.c.b16 %v558, %v557
        %575 = vmatprep.subr.bf16.mxu0 0
        %576 = vmatpush1.bf16.msra.mxu0 %v559
        %577 = vmatprep.subr.bf16.mxu0 0
        %578 = vmatpush1.bf16.msra.mxu0 %v560
        %579 = vmatprep.subr.bf16.mxu0 0
        %580 = vmatpush1.bf16.msra.mxu0 %v561
        %581 = vmatprep.subr.bf16.mxu0 0
        %582 = vmatpush1.bf16.msra.mxu0 %v562
        %583 = vmatprep.subr.bf16.mxu0 0
        %584 = vmatpush1.bf16.msra.mxu0 %v563
        %585 = vmatprep.subr.bf16.mxu0 0
        %586 = vmatpush1.bf16.msra.mxu0 %v564
        %587 = vmatprep.subr.bf16.mxu0 0
        %588 = vmatpush1.bf16.msra.mxu0 %v565
        %589 = vmatprep.subr.bf16.mxu0 0
        %590 = vmatpush1.bf16.msra.mxu0 %v566
        %591 = vmatprep.subr.bf16.mxu0 0
        %592 = vmatpush1.bf16.msra.mxu0 0
        %593 = vmatprep.subr.bf16.mxu0 0
        %594 = vmatpush1.bf16.msra.mxu0 0
        %595 = vmatprep.subr.bf16.mxu0 0
        %596 = vmatpush1.bf16.msra.mxu0 0
        %597 = vmatprep.subr.bf16.mxu0 0
        %598 = vmatpush1.bf16.msra.mxu0 0
        %599 = vmatprep.subr.bf16.mxu0 0
        %600 = vmatpush1.bf16.msra.mxu0 0
        %601 = vmatprep.subr.bf16.mxu0 0
        %602 = vmatpush1.bf16.msra.mxu0 0
        %603 = vmatprep.subr.bf16.mxu0 0
        %604 = vmatpush1.bf16.msra.mxu0 0
        %605 = vmatprep.subr.bf16.mxu0 0
        %606 = vmatpush1.bf16.msra.mxu0 0
        %607 = vmatprep.mubr.bf16.mxu0 0
        %608 = vmatmul.mubr.bf16.gmra.mrb[0].mxu0 %v503
        %v609 = vpop.f32.mrb[0].mxu0
        %v610 = vadd.f32 %v525, %v609
        %v611 = vpop.f32.mrb[0].mxu0
        %v612 = vpop.f32.mrb[0].mxu0
        %v613 = vadd.f32 %v525, %v612
        %v614 = vpop.f32.mrb[0].mxu0
        %615 = vdwg.mxu0
        %v616 = vmax.f32 %v610, 0.0
        %v617 = vmax.f32 %v613, 0.0
        %v618 = vpack.c.bf16 %v617, %v616
        %v619 = vld [vmem:[#allocation6] sm:$0xf]
        %v620 = vld [vmem:[#allocation6 + $0x4] sm:$0xf]
        %v621 = vld [vmem:[#allocation6 + $0x8] sm:$0xf]
        %v622 = vld [vmem:[#allocation6 + $0xc] sm:$0xf]
        %v623 = vld [vmem:[#allocation6 + $0x10] sm:$0xf]
        %v624 = vld [vmem:[#allocation6 + $0x14] sm:$0xf]
        %v625 = vld [vmem:[#allocation6 + $0x18] sm:$0xf]
        %v626 = vld [vmem:[#allocation6 + $0x1c] sm:$0xf]
        %v627 = vld [vmem:[#allocation6 + $0x20] sm:$0xf]
        %v628 = vld [vmem:[#allocation6 + $0x24] sm:$0xf]
        %v629 = vld [vmem:[#allocation6 + $0x28] sm:$0xf]
        %v630 = vld [vmem:[#allocation6 + $0x2c] sm:$0xf]
        %v631 = vld [vmem:[#allocation6 + $0x30] sm:$0xf]
        %v632 = vld [vmem:[#allocation6 + $0x34] sm:$0xf]
        %v633 = vld [vmem:[#allocation6 + $0x38] sm:$0xf]
        %v634 = vld [vmem:[#allocation6 + $0x3c] sm:$0xf]
        %v635 = vld [vmem:[%s6] sm:$0x1]
        %v637 = vlaneseq
        %v638 = vshrl.u32 %v637, 7
        %v639 = vsub.s32 0, %v638
        %v640 = vrot.slane %v635, %v639
        %v658 = vunpack.c.l.b16 %v619
        %v659 = vunpack.c.l.b16 %v620
        %v660 = vunpack.c.l.b16 %v621
        %v661 = vunpack.c.l.b16 %v622
        %v662 = vunpack.c.l.b16 %v623
        %v663 = vunpack.c.l.b16 %v624
        %v664 = vunpack.c.l.b16 %v625
        %v665 = vunpack.c.l.b16 %v626
        %v666 = vunpack.c.l.b16 %v627
        %v667 = vunpack.c.l.b16 %v628
        %v668 = vunpack.c.l.b16 %v629
        %v669 = vunpack.c.l.b16 %v630
        %v670 = vunpack.c.l.b16 %v631
        %v671 = vunpack.c.l.b16 %v632
        %v672 = vunpack.c.l.b16 %v633
        %v673 = vunpack.c.l.b16 %v634
        %v674 = vpack.c.b16 %v659, %v658
        %v675 = vpack.c.b16 %v661, %v660
        %v676 = vpack.c.b16 %v663, %v662
        %v677 = vpack.c.b16 %v665, %v664
        %v678 = vpack.c.b16 %v667, %v666
        %v679 = vpack.c.b16 %v669, %v668
        %v680 = vpack.c.b16 %v671, %v670
        %v681 = vpack.c.b16 %v673, %v672
        %690 = vmatprep.subr.bf16.mxu0 0
        %691 = vmatpush1.bf16.msra.mxu0 %v674
        %692 = vmatprep.subr.bf16.mxu0 0
        %693 = vmatpush1.bf16.msra.mxu0 %v675
        %694 = vmatprep.subr.bf16.mxu0 0
        %695 = vmatpush1.bf16.msra.mxu0 %v676
        %696 = vmatprep.subr.bf16.mxu0 0
        %697 = vmatpush1.bf16.msra.mxu0 %v677
        %698 = vmatprep.subr.bf16.mxu0 0
        %699 = vmatpush1.bf16.msra.mxu0 %v678
        %700 = vmatprep.subr.bf16.mxu0 0
        %701 = vmatpush1.bf16.msra.mxu0 %v679
        %702 = vmatprep.subr.bf16.mxu0 0
        %703 = vmatpush1.bf16.msra.mxu0 %v680
        %704 = vmatprep.subr.bf16.mxu0 0
        %705 = vmatpush1.bf16.msra.mxu0 %v681
        %706 = vmatprep.subr.bf16.mxu0 0
        %707 = vmatpush1.bf16.msra.mxu0 0
        %708 = vmatprep.subr.bf16.mxu0 0
        %709 = vmatpush1.bf16.msra.mxu0 0
        %710 = vmatprep.subr.bf16.mxu0 0
        %711 = vmatpush1.bf16.msra.mxu0 0
        %712 = vmatprep.subr.bf16.mxu0 0
        %713 = vmatpush1.bf16.msra.mxu0 0
        %714 = vmatprep.subr.bf16.mxu0 0
        %715 = vmatpush1.bf16.msra.mxu0 0
        %716 = vmatprep.subr.bf16.mxu0 0
        %717 = vmatpush1.bf16.msra.mxu0 0
        %718 = vmatprep.subr.bf16.mxu0 0
        %719 = vmatpush1.bf16.msra.mxu0 0
        %720 = vmatprep.subr.bf16.mxu0 0
        %721 = vmatpush1.bf16.msra.mxu0 0
        %722 = vmatprep.mubr.bf16.mxu0 0
        %723 = vmatmul.mubr.bf16.gmra.mrb[0].mxu0 %v618
        %v724 = vpop.f32.mrb[0].mxu0
        %v725 = vadd.f32 %v640, %v724
        %v726 = vpop.f32.mrb[0].mxu0
        %v727 = vpop.f32.mrb[0].mxu0
        %v728 = vadd.f32 %v640, %v727
        %v729 = vpop.f32.mrb[0].mxu0
        %730 = vdwg.mxu0
        %v731 = vmax.f32 %v725, 0.0
        %v732 = vmax.f32 %v728, 0.0
        %v733 = vpack.c.bf16 %v732, %v731
        %v734 = vld [vmem:[%s7] sm:$0xf]
        %v735 = vld [vmem:[%s7 + $0x4] sm:$0xf]
        %v736 = vld [vmem:[%s7 + $0x8] sm:$0xf]
        %v737 = vld [vmem:[%s7 + $0xc] sm:$0xf]
        %v738 = vld [vmem:[%s7 + $0x10] sm:$0xf]
        %v739 = vld [vmem:[%s7 + $0x14] sm:$0xf]
        %v740 = vld [vmem:[%s7 + $0x18] sm:$0xf]
        %v741 = vld [vmem:[%s7 + $0x1c] sm:$0xf]
        %v742 = vld [vmem:[%s7 + $0x20] sm:$0xf]
        %v743 = vld [vmem:[%s7 + $0x24] sm:$0xf]
        %v744 = vld [vmem:[%s7 + $0x28] sm:$0xf]
        %v745 = vld [vmem:[%s7 + $0x2c] sm:$0xf]
        %v746 = vld [vmem:[%s7 + $0x30] sm:$0xf]
        %v747 = vld [vmem:[%s7 + $0x34] sm:$0xf]
        %v748 = vld [vmem:[%s7 + $0x38] sm:$0xf]
        %v749 = vld [vmem:[%s7 + $0x3c] sm:$0xf]
        %v750 = vld [vmem:[%s8] sm:$0x1]
        %v752 = vlaneseq
        %v753 = vshrl.u32 %v752, 7
        %v754 = vsub.s32 0, %v753
        %v755 = vrot.slane %v750, %v754
        %v773 = vunpack.c.l.b16 %v734
        %v774 = vunpack.c.l.b16 %v735
        %v775 = vunpack.c.l.b16 %v736
        %v776 = vunpack.c.l.b16 %v737
        %v777 = vunpack.c.l.b16 %v738
        %v778 = vunpack.c.l.b16 %v739
        %v779 = vunpack.c.l.b16 %v740
        %v780 = vunpack.c.l.b16 %v741
        %v781 = vunpack.c.l.b16 %v742
        %v782 = vunpack.c.l.b16 %v743
        %v783 = vunpack.c.l.b16 %v744
        %v784 = vunpack.c.l.b16 %v745
        %v785 = vunpack.c.l.b16 %v746
        %v786 = vunpack.c.l.b16 %v747
        %v787 = vunpack.c.l.b16 %v748
        %v788 = vunpack.c.l.b16 %v749
        %v789 = vpack.c.b16 %v774, %v773
        %v790 = vpack.c.b16 %v776, %v775
        %v791 = vpack.c.b16 %v778, %v777
        %v792 = vpack.c.b16 %v780, %v779
        %v793 = vpack.c.b16 %v782, %v781
        %v794 = vpack.c.b16 %v784, %v783
        %v795 = vpack.c.b16 %v786, %v785
        %v796 = vpack.c.b16 %v788, %v787
        %805 = vmatprep.subr.bf16.mxu0 0
        %806 = vmatpush1.bf16.msra.mxu0 %v789
        %807 = vmatprep.subr.bf16.mxu0 0
        %808 = vmatpush1.bf16.msra.mxu0 %v790
        %809 = vmatprep.subr.bf16.mxu0 0
        %810 = vmatpush1.bf16.msra.mxu0 %v791
        %811 = vmatprep.subr.bf16.mxu0 0
        %812 = vmatpush1.bf16.msra.mxu0 %v792
        %813 = vmatprep.subr.bf16.mxu0 0
        %814 = vmatpush1.bf16.msra.mxu0 %v793
        %815 = vmatprep.subr.bf16.mxu0 0
        %816 = vmatpush1.bf16.msra.mxu0 %v794
        %817 = vmatprep.subr.bf16.mxu0 0
        %818 = vmatpush1.bf16.msra.mxu0 %v795
        %819 = vmatprep.subr.bf16.mxu0 0
        %820 = vmatpush1.bf16.msra.mxu0 %v796
        %821 = vmatprep.subr.bf16.mxu0 0
        %822 = vmatpush1.bf16.msra.mxu0 0
        %823 = vmatprep.subr.bf16.mxu0 0
        %824 = vmatpush1.bf16.msra.mxu0 0
        %825 = vmatprep.subr.bf16.mxu0 0
        %826 = vmatpush1.bf16.msra.mxu0 0
        %827 = vmatprep.subr.bf16.mxu0 0
        %828 = vmatpush1.bf16.msra.mxu0 0
        %829 = vmatprep.subr.bf16.mxu0 0
        %830 = vmatpush1.bf16.msra.mxu0 0
        %831 = vmatprep.subr.bf16.mxu0 0
        %832 = vmatpush1.bf16.msra.mxu0 0
        %833 = vmatprep.subr.bf16.mxu0 0
        %834 = vmatpush1.bf16.msra.mxu0 0
        %835 = vmatprep.subr.bf16.mxu0 0
        %836 = vmatpush1.bf16.msra.mxu0 0
        %837 = vmatprep.mubr.bf16.mxu0 0
        %838 = vmatmul.mubr.bf16.gmra.mrb[0].mxu0 %v733
        %v839 = vpop.f32.mrb[0].mxu0
        %v840 = vadd.f32 %v755, %v839
        %v841 = vpop.f32.mrb[0].mxu0
        %v842 = vpop.f32.mrb[0].mxu0
        %v843 = vadd.f32 %v755, %v842
        %v844 = vpop.f32.mrb[0].mxu0
        %845 = vdwg.mxu0
        %v846 = vxor.u32 %v840, 2147483648
        %v847 = vxor.u32 %v843, 2147483648
        %v848 = vmul.f32 %v846, 1.442695
        %v849 = vpow.pop %v848
        %v850 = vmul.f32 %v847, 1.442695
        %v851 = vpow.pop %v850
        %v852 = vadd.f32 %v849, 1.0
        %v853 = vadd.f32 %v851, 1.0
        %v854 = vrcp.pop %v852
        %v855 = vmul.f32 1.0, %v854
        %v856 = vrcp.pop %v853
        %v857 = vmul.f32 1.0, %v856
        %v858 = vpack.c.bf16 %v857, %v855
        %v860 = vunpack.c.l.b16 %v858
        %v861 = vunpack.c.h.b16 %v858
        %v862 = vpack.c.b16 %v860, %v860
        %v863 = vpack.c.b16 %v861, %v861
        %866 = vst [vmem:[%s378] sm:$0xf] %v862
        %867 = vst [vmem:[%s378 + $0x4] sm:$0xf] %v863
        %s868 = smul.u32 2, %s22
        %p869 = scmp.lt.s32.totalorder %s868, 3
        %s870 = scalar_select %p869, %s868, 3
        %s871 = smul.addr %s870, 4
        %s872 = scalar_lea.vmem %s9, %s871
        // Predicated region
        $region69: #{deep_relu_forward.1} parent=55 // pred_check
          %p873 = pneg %p234
        $region70: #{deep_relu_forward.1} parent=55 // pred_check_branch
          %875 = sbr.rel (%p873) target = $region72
        $region71: #{deep_relu_forward.1} parent=55 // pred_region
          %s876 = smul.u32 2, %s22
        $region72: #{deep_relu_forward.1} parent=55 // pred_fallthru
          _
      $region56: #{deep_relu_forward.1} parent=5 // pred_fallthru
        _
      %p877 = scmp.le.s32.totalorder 2, %s17
      // Predicated region
      $region73: #{deep_relu_forward.1} parent=5 // pred_check
        %p878 = pneg %p877
      $region74: #{deep_relu_forward.1} parent=5 // pred_check_branch
        %880 = sbr.rel (%p878) target = $region76
      $region75: #{deep_relu_forward.1} parent=5 // pred_region
        %s881 = ssub.s32 %s17, 2
        // Predicated region
        $region77: #{deep_relu_forward.1} parent=75 // pred_check
          %p882 = pneg %p240
        $region78: #{deep_relu_forward.1} parent=75 // pred_check_branch
          %884 = sbr.rel (%p882) target = $region80
        $region79: #{deep_relu_forward.1} parent=75 // pred_region
          %s885 = smul.u32 2, %s23
          %p886 = scmp.lt.s32.totalorder %s885, 3
          %s887 = scalar_select %p886, %s885, 3
          %s888 = smul.addr %s887, 4
          %s889 = scalar_lea.vmem %s9, %s888
        $region80: #{deep_relu_forward.1} parent=75 // pred_fallthru
          _
      $region76: #{deep_relu_forward.1} parent=5 // pred_fallthru
        _
    $region6: #{deep_relu_forward.1} parent=1 // loop_footer
      %s21 = sadd.s32 1, %s17
    $region7: #{deep_relu_forward.1} parent=1 // loop_footer_branch
      %16 = sbr.rel target = $region3
    $region8: #{deep_relu_forward.1} parent=1 // loop_exit
      _
    %890 = vsyncpa [#allocation3], 1
    %s891 = scalar_lea.sflag [#allocation3], 1
    %892 = vsyncpa %s891, 1
    %893 = vsyncpa [#allocation5], 1

</llo_original>
